<compile_context>
chip_gen: v7x
topology: tpu7x:2x2x1
jax: 0.10.0
libtpu: 0.0.40
codegen_flags: <defaults>
</compile_context>

<pallas_src>
import functools

import jax
import jax.numpy as jnp
from jax.experimental import pallas as pl
from jax.experimental.pallas import tpu as pltpu

# Embedding sizes (the module's time_embedding_size dict)
TIME_EMBEDDING_SIZE = {"holiday": 8, "month": 8, "weekday": 8}
HOLIDAY_ROWS = 2 + 1   # nn.Embedding(3, ...)
MONTH_ROWS = 12 + 1    # nn.Embedding(13, ...)
WEEKDAY_ROWS = 7 + 1   # nn.Embedding(8, ...)


def _time_embeddings_kernel(table_ref, time_ref, out_ref, *, groups, n_emb, ts1,
                            chunk, compute_dtype):
    """One grid step handles one (batch, seq-tile) block.

    table_ref : SMEM (n_table_elems,) f32 -- the three embedding tables, row-major,
                concatenated flat; read as scalars (cheap broadcast operands on VPU).
    time_ref  : VMEM (5, TS1, 128) f32    -- seq stays on the lane axis (dense vregs).
    out_ref   : VMEM (E_out, TS1, 128)    -- lane-dense output, one plane per feature.

    The tile is processed in `chunk`-sublane pieces so at most ~15-30 vregs are live
    at a time (no spills even at TS1=512).
    """
    out_dtype = out_ref.dtype

    def do_chunk(row0, rows):
        sl = pl.ds(row0, rows)
        for id_row, n_rows, e_size, flat_off, out_off in groups:
            ids = time_ref[id_row, sl, :]                       # (rows, 128) f32
            # ids are exact small integers in f32: compare in f32, row 0 needs no mask.
            masks = [ids == float(r) for r in range(1, n_rows)]
            for e in range(e_size):
                # Chained selects: out[e, s] = table[id[s], e].
                # Chain starts from the row-0 value, so OOB ids map to row 0.
                acc = jnp.full((rows, 128), table_ref[flat_off + e],
                               dtype=compute_dtype)
                for r in range(1, n_rows):
                    val = table_ref[flat_off + r * e_size + e].astype(compute_dtype)
                    acc = jnp.where(masks[r - 1], val, acc)
                out_ref[out_off + e, sl, :] = acc.astype(out_dtype)
        # sin / cos passthrough rows
        out_ref[n_emb, sl, :] = time_ref[3, sl, :].astype(out_dtype)
        out_ref[n_emb + 1, sl, :] = time_ref[4, sl, :].astype(out_dtype)

    n_full = ts1 // chunk
    rem = ts1 - n_full * chunk

    if n_full > 0:
        @pl.loop(0, n_full)
        def _(c):
            do_chunk(pl.multiple_of(c * chunk, chunk), chunk)
    if rem > 0:
        do_chunk(n_full * chunk, rem)


def time_embeddings(time_ids, hol_table, mon_table, wd_table, *,
                    channels_last=True, out_dtype=jnp.float32,
                    compute_dtype=jnp.float32):
    """time_ids: float [B, 5, S] -> [B, S, Eh+Em+Ew+2] (PyTorch layout).

    channels_last=False returns [B, E_out, S] with no extra HBM traffic (recommended
    when downstream can consume channels-first - the kernel is HBM-bound on v5e/v6e
    and the transpose roughly triples output-side HBM traffic).
    out_dtype=jnp.bfloat16 halves output writeback (useful on all generations);
    compute_dtype=jnp.bfloat16 additionally runs the select chain packed (v6e/v7x).
    """
    B, five, S = time_ids.shape
    assert five == 5
    tables = [hol_table, mon_table, wd_table]
    n_emb = sum(int(t.shape[1]) for t in tables)
    E_out = n_emb + 2

    # Single flat f32 table resident in SMEM: one input instead of three VMEM DMAs.
    flat_table = jnp.concatenate([t.reshape(-1) for t in tables]).astype(jnp.float32)

    # Static per-group metadata: (id_row, n_rows, e_size, flat_offset, out_offset).
    groups = []
    flat_off = 0
    out_off = 0
    for id_row, t in enumerate(tables):
        n_rows, e_size = int(t.shape[0]), int(t.shape[1])
        groups.append((id_row, n_rows, e_size, flat_off, out_off))
        flat_off += n_rows * e_size
        out_off += e_size

    # Keep S lane-major: pad S to a multiple of 128 lanes (zeros -> row-0 embeddings,
    # sliced off below), then split S -> (S1, 128) with a free row-major reshape.
    L = 128
    S_pad = ((S + L - 1) // L) * L
    x = time_ids.astype(jnp.float32)
    if S_pad != S:
        x = jnp.pad(x, ((0, 0), (0, 0), (0, S_pad - S)))
    S1 = S_pad // L

    # Seq-tile size along S1: biggest candidate that divides S1.  Double-buffered
    # footprint at TS1=512 is ~16 MiB (f32 out), covered by vmem_limit_bytes below.
    TS1 = S1
    for cand in (512, 256, 128, 64, 32, 16, 8):
        if S1 % cand == 0:
            TS1 = cand
            break
    # v7x has 2 TensorCores: keep at least 2 grid steps when we can do so cheaply.
    while B * (S1 // TS1) < 2 and TS1 % 16 == 0:
        TS1 //= 2
    grid = (B, S1 // TS1)

    time_r = x.reshape(B, 5, S1, L)

    out_dtype = jnp.dtype(out_dtype)
    compute_dtype = jnp.dtype(compute_dtype)
    # 8 sublanes per chunk for 32-bit output, 16 for bf16 so stores stay tile-aligned.
    chunk = 8 * max(1, 4 // out_dtype.itemsize)

    kernel = functools.partial(_time_embeddings_kernel,
                               groups=tuple(groups), n_emb=n_emb, ts1=TS1,
                               chunk=chunk, compute_dtype=compute_dtype)

    bytes_accessed = B * S_pad * (5 * 4 + E_out * out_dtype.itemsize) \
        + int(flat_table.size) * 4
    flops = B * S_pad * sum((nr - 1) * (1 + es) for _, nr, es, _, _ in groups)

    out = pl.pallas_call(
        kernel,
        out_shape=jax.ShapeDtypeStruct((B, E_out, S1, L), out_dtype),
        grid_spec=pltpu.PrefetchScalarGridSpec(
            num_scalar_prefetch=0,
            grid=grid,
            in_specs=[
                pl.BlockSpec(memory_space=pltpu.MemorySpace.SMEM),
                pl.BlockSpec((None, 5, TS1, L), lambda b, s: (b, 0, s, 0)),
            ],
            out_specs=pl.BlockSpec((None, E_out, TS1, L), lambda b, s: (b, 0, s, 0)),
        ),
        compiler_params=pltpu.CompilerParams(
            dimension_semantics=("parallel", "parallel"),
            vmem_limit_bytes=32 * 1024 * 1024),
        cost_estimate=pl.CostEstimate(
            flops=int(flops), transcendentals=0, bytes_accessed=int(bytes_accessed)),
    )(flat_table, time_r)

    out = out.reshape(B, E_out, S_pad)
    if S_pad != S:
        out = out[:, :, :S]
    if channels_last:
        # PyTorch layout [B, S, E_out]: one XLA transpose outside the kernel.  Callers
        # that can consume channels-first should pass channels_last=False instead.
        # TODO(synk): evaluate emitting [B, S1, 128, 32] (E padded to 32 lanes)
        # directly from the kernel and benchmark against this XLA transpose.
        out = out.swapaxes(1, 2)
    return out


def _reference(time_ids, hol_table, mon_table, wd_table):
    hol = jnp.take(hol_table, time_ids[:, 0, :].astype(jnp.int32), axis=0)
    mon = jnp.take(mon_table, time_ids[:, 1, :].astype(jnp.int32), axis=0)
    wd = jnp.take(wd_table, time_ids[:, 2, :].astype(jnp.int32), axis=0)
    sin = time_ids[:, 3, :][..., None]
    cos = time_ids[:, 4, :][..., None]
    return jnp.concatenate([hol, mon, wd, sin, cos], axis=-1)


if __name__ == "__main__":
    key = jax.random.PRNGKey(0)
    k_hol, k_mon, k_wd, _, _ = jax.random.split(key, 5)

    Eh = TIME_EMBEDDING_SIZE["holiday"]
    Em = TIME_EMBEDDING_SIZE["month"]
    Ew = TIME_EMBEDDING_SIZE["weekday"]
    E_out = Eh + Em + Ew + 2

    # Deterministic "parameters" (normal init like nn.Embedding default).
    hol_table = jax.random.normal(k_hol, (HOLIDAY_ROWS, Eh), jnp.float32)
    mon_table = jax.random.normal(k_mon, (MONTH_ROWS, Em), jnp.float32)
    wd_table = jax.random.normal(k_wd, (WEEKDAY_ROWS, Ew), jnp.float32)

    def make_time_ids(k, B, S):
        k_ids, k_hm = jax.random.split(k)
        hol_ids = jax.random.randint(k_ids, (B, S), 0, HOLIDAY_ROWS)
        mon_ids = jax.random.randint(jax.random.fold_in(k_ids, 1), (B, S), 0, MONTH_ROWS)
        wd_ids = jax.random.randint(jax.random.fold_in(k_ids, 2), (B, S), 0, WEEKDAY_ROWS)
        hm = jax.random.uniform(k_hm, (B, S), jnp.float32, 0.0, 2.0 * jnp.pi)
        return jnp.stack(
            [hol_ids.astype(jnp.float32),
             mon_ids.astype(jnp.float32),
             wd_ids.astype(jnp.float32),
             jnp.sin(hm), jnp.cos(hm)],
            axis=1,
        )  # [B, 5, S]

    # Shapes covering: tiny S (<128, padded), non-multiple-of-128 S (padded), the
    # S1==TS1 single-tile path, and a larger S exercising the chunk loop + >=2 grid
    # steps for dual-TC chips.
    for (B, S) in ((2, 8), (2, 200), (2, 1024), (1, 16384)):
        time_ids = make_time_ids(jax.random.fold_in(key, S), B, S)
        ref = _reference(time_ids, hol_table, mon_table, wd_table)

        out = jax.block_until_ready(
            time_embeddings(time_ids, hol_table, mon_table, wd_table))
        assert out.shape == (B, S, E_out)
        assert jnp.allclose(out, ref, atol=1e-5), f"mismatch vs reference (S={S})"

        # Channels-first fast path (no output transpose).
        out_cf = jax.block_until_ready(
            time_embeddings(time_ids, hol_table, mon_table, wd_table,
                            channels_last=False))
        assert out_cf.shape == (B, E_out, S)
        assert jnp.allclose(out_cf.swapaxes(1, 2), ref, atol=1e-5), \
            f"mismatch vs reference, channels_first (S={S})"

    # bf16 output path (halved output writeback; compute stays f32).
    B, S = 2, 1024
    time_ids = make_time_ids(jax.random.fold_in(key, S), B, S)
    ref = _reference(time_ids, hol_table, mon_table, wd_table)
    out_bf16 = jax.block_until_ready(
        time_embeddings(time_ids, hol_table, mon_table, wd_table,
                        out_dtype=jnp.bfloat16))
    assert out_bf16.dtype == jnp.bfloat16
    assert jnp.allclose(out_bf16.astype(jnp.float32), ref, atol=5e-2), \
        "mismatch vs reference (bf16 output)"

    print("KERNEL_OK")
</pallas_src>

<mosaic_0001>
module attributes {stable_mosaic.version = 11 : i64} {
  func.func @_time_embeddings_kernel(%arg0: i32, %arg1: i32, %arg2: memref<192xf32, #tpu.memory_space<smem>>, %arg3: memref<1x5x1x128xf32, #tpu.memory_space<vmem>>, %arg4: memref<1x26x1x128xf32, #tpu.memory_space<vmem>>) attributes {dimension_semantics = [#tpu.dimension_semantics<parallel>, #tpu.dimension_semantics<parallel>], iteration_bounds = array<i64: 2, 1>, scalar_prefetch = 0 : i64, scratch_operands = 0 : i64, tpu.core_type = #tpu.core_type<tc>, window_params = [{transform_indices = @transform_0, window_bounds = array<i64: 192>}, {transform_indices = @transform_1, window_bounds = array<i64: 1, 5, 1, 128>}, {transform_indices = @transform_2, window_bounds = array<i64: 1, 26, 1, 128>}]} {
    %c0 = arith.constant 0 : index
    %c0_0 = arith.constant 0 : index
    %c0_1 = arith.constant 0 : index
    %c0_2 = arith.constant 0 : index
    %0 = vector.load %arg3[%c0, %c0_0, %c0_1, %c0_2] : memref<1x5x1x128xf32, #tpu.memory_space<vmem>>, vector<1x1x1x128xf32>
    %1 = vector.shape_cast %0 : vector<1x1x1x128xf32> to vector<1x128xf32>
    %cst = arith.constant 1.000000e+00 : f32
    %2 = vector.broadcast %cst : f32 to vector<1x128xf32>
    %3 = arith.cmpf oeq, %1, %2 : vector<1x128xf32>
    %cst_3 = arith.constant 2.000000e+00 : f32
    %4 = vector.broadcast %cst_3 : f32 to vector<1x128xf32>
    %5 = arith.cmpf oeq, %1, %4 : vector<1x128xf32>
    %c0_4 = arith.constant 0 : index
    %6 = memref.load %arg2[%c0_4] : memref<192xf32, #tpu.memory_space<smem>>
    %7 = vector.broadcast %6 : f32 to vector<1x128xf32>
    %c8 = arith.constant 8 : index
    %8 = memref.load %arg2[%c8] : memref<192xf32, #tpu.memory_space<smem>>
    %9 = vector.broadcast %8 : f32 to vector<1x128xf32>
    %10 = arith.select %3, %9, %7 : vector<1x128xi1>, vector<1x128xf32>
    %c16 = arith.constant 16 : index
    %11 = memref.load %arg2[%c16] : memref<192xf32, #tpu.memory_space<smem>>
    %12 = vector.broadcast %11 : f32 to vector<1x128xf32>
    %13 = arith.select %5, %12, %10 : vector<1x128xi1>, vector<1x128xf32>
    %c0_5 = arith.constant 0 : index
    %c0_6 = arith.constant 0 : index
    %c0_7 = arith.constant 0 : index
    %c0_8 = arith.constant 0 : index
    %14 = vector.load %arg4[%c0_5, %c0_6, %c0_7, %c0_8] : memref<1x26x1x128xf32, #tpu.memory_space<vmem>>, vector<1x1x1x128xf32>
    %15 = vector.shape_cast %14 : vector<1x1x1x128xf32> to vector<1x128xf32>
    %16 = vector.shape_cast %13 : vector<1x128xf32> to vector<1x1x1x128xf32>
    tpu.vector_store %arg4[%c0_5, %c0_6, %c0_7, %c0_8], %16 {strides = array<i32>} : memref<1x26x1x128xf32, #tpu.memory_space<vmem>>, vector<1x1x1x128xf32>,
    %c1 = arith.constant 1 : index
    %17 = memref.load %arg2[%c1] : memref<192xf32, #tpu.memory_space<smem>>
    %18 = vector.broadcast %17 : f32 to vector<1x128xf32>
    %c9 = arith.constant 9 : index
    %19 = memref.load %arg2[%c9] : memref<192xf32, #tpu.memory_space<smem>>
    %20 = vector.broadcast %19 : f32 to vector<1x128xf32>
    %21 = arith.select %3, %20, %18 : vector<1x128xi1>, vector<1x128xf32>
    %c17 = arith.constant 17 : index
    %22 = memref.load %arg2[%c17] : memref<192xf32, #tpu.memory_space<smem>>
    %23 = vector.broadcast %22 : f32 to vector<1x128xf32>
    %24 = arith.select %5, %23, %21 : vector<1x128xi1>, vector<1x128xf32>
    %c0_9 = arith.constant 0 : index
    %c1_10 = arith.constant 1 : index
    %c0_11 = arith.constant 0 : index
    %c0_12 = arith.constant 0 : index
    %25 = vector.load %arg4[%c0_9, %c1_10, %c0_11, %c0_12] : memref<1x26x1x128xf32, #tpu.memory_space<vmem>>, vector<1x1x1x128xf32>
    %26 = vector.shape_cast %25 : vector<1x1x1x128xf32> to vector<1x128xf32>
    %27 = vector.shape_cast %24 : vector<1x128xf32> to vector<1x1x1x128xf32>
    tpu.vector_store %arg4[%c0_9, %c1_10, %c0_11, %c0_12], %27 {strides = array<i32>} : memref<1x26x1x128xf32, #tpu.memory_space<vmem>>, vector<1x1x1x128xf32>,
    %c2 = arith.constant 2 : index
    %28 = memref.load %arg2[%c2] : memref<192xf32, #tpu.memory_space<smem>>
    %29 = vector.broadcast %28 : f32 to vector<1x128xf32>
    %c10 = arith.constant 10 : index
    %30 = memref.load %arg2[%c10] : memref<192xf32, #tpu.memory_space<smem>>
    %31 = vector.broadcast %30 : f32 to vector<1x128xf32>
    %32 = arith.select %3, %31, %29 : vector<1x128xi1>, vector<1x128xf32>
    %c18 = arith.constant 18 : index
    %33 = memref.load %arg2[%c18] : memref<192xf32, #tpu.memory_space<smem>>
    %34 = vector.broadcast %33 : f32 to vector<1x128xf32>
    %35 = arith.select %5, %34, %32 : vector<1x128xi1>, vector<1x128xf32>
    %c0_13 = arith.constant 0 : index
    %c2_14 = arith.constant 2 : index
    %c0_15 = arith.constant 0 : index
    %c0_16 = arith.constant 0 : index
    %36 = vector.load %arg4[%c0_13, %c2_14, %c0_15, %c0_16] : memref<1x26x1x128xf32, #tpu.memory_space<vmem>>, vector<1x1x1x128xf32>
    %37 = vector.shape_cast %36 : vector<1x1x1x128xf32> to vector<1x128xf32>
    %38 = vector.shape_cast %35 : vector<1x128xf32> to vector<1x1x1x128xf32>
    tpu.vector_store %arg4[%c0_13, %c2_14, %c0_15, %c0_16], %38 {strides = array<i32>} : memref<1x26x1x128xf32, #tpu.memory_space<vmem>>, vector<1x1x1x128xf32>,
    %c3 = arith.constant 3 : index
    %39 = memref.load %arg2[%c3] : memref<192xf32, #tpu.memory_space<smem>>
    %40 = vector.broadcast %39 : f32 to vector<1x128xf32>
    %c11 = arith.constant 11 : index
    %41 = memref.load %arg2[%c11] : memref<192xf32, #tpu.memory_space<smem>>
    %42 = vector.broadcast %41 : f32 to vector<1x128xf32>
    %43 = arith.select %3, %42, %40 : vector<1x128xi1>, vector<1x128xf32>
    %c19 = arith.constant 19 : index
    %44 = memref.load %arg2[%c19] : memref<192xf32, #tpu.memory_space<smem>>
    %45 = vector.broadcast %44 : f32 to vector<1x128xf32>
    %46 = arith.select %5, %45, %43 : vector<1x128xi1>, vector<1x128xf32>
    %c0_17 = arith.constant 0 : index
    %c3_18 = arith.constant 3 : index
    %c0_19 = arith.constant 0 : index
    %c0_20 = arith.constant 0 : index
    %47 = vector.load %arg4[%c0_17, %c3_18, %c0_19, %c0_20] : memref<1x26x1x128xf32, #tpu.memory_space<vmem>>, vector<1x1x1x128xf32>
    %48 = vector.shape_cast %47 : vector<1x1x1x128xf32> to vector<1x128xf32>
    %49 = vector.shape_cast %46 : vector<1x128xf32> to vector<1x1x1x128xf32>
    tpu.vector_store %arg4[%c0_17, %c3_18, %c0_19, %c0_20], %49 {strides = array<i32>} : memref<1x26x1x128xf32, #tpu.memory_space<vmem>>, vector<1x1x1x128xf32>,
    %c4 = arith.constant 4 : index
    %50 = memref.load %arg2[%c4] : memref<192xf32, #tpu.memory_space<smem>>
    %51 = vector.broadcast %50 : f32 to vector<1x128xf32>
    %c12 = arith.constant 12 : index
    %52 = memref.load %arg2[%c12] : memref<192xf32, #tpu.memory_space<smem>>
    %53 = vector.broadcast %52 : f32 to vector<1x128xf32>
    %54 = arith.select %3, %53, %51 : vector<1x128xi1>, vector<1x128xf32>
    %c20 = arith.constant 20 : index
    %55 = memref.load %arg2[%c20] : memref<192xf32, #tpu.memory_space<smem>>
    %56 = vector.broadcast %55 : f32 to vector<1x128xf32>
    %57 = arith.select %5, %56, %54 : vector<1x128xi1>, vector<1x128xf32>
    %c0_21 = arith.constant 0 : index
    %c4_22 = arith.constant 4 : index
    %c0_23 = arith.constant 0 : index
    %c0_24 = arith.constant 0 : index
    %58 = vector.load %arg4[%c0_21, %c4_22, %c0_23, %c0_24] : memref<1x26x1x128xf32, #tpu.memory_space<vmem>>, vector<1x1x1x128xf32>
    %59 = vector.shape_cast %58 : vector<1x1x1x128xf32> to vector<1x128xf32>
    %60 = vector.shape_cast %57 : vector<1x128xf32> to vector<1x1x1x128xf32>
    tpu.vector_store %arg4[%c0_21, %c4_22, %c0_23, %c0_24], %60 {strides = array<i32>} : memref<1x26x1x128xf32, #tpu.memory_space<vmem>>, vector<1x1x1x128xf32>,
    %c5 = arith.constant 5 : index
    %61 = memref.load %arg2[%c5] : memref<192xf32, #tpu.memory_space<smem>>
    %62 = vector.broadcast %61 : f32 to vector<1x128xf32>
    %c13 = arith.constant 13 : index
    %63 = memref.load %arg2[%c13] : memref<192xf32, #tpu.memory_space<smem>>
    %64 = vector.broadcast %63 : f32 to vector<1x128xf32>
    %65 = arith.select %3, %64, %62 : vector<1x128xi1>, vector<1x128xf32>
    %c21 = arith.constant 21 : index
    %66 = memref.load %arg2[%c21] : memref<192xf32, #tpu.memory_space<smem>>
    %67 = vector.broadcast %66 : f32 to vector<1x128xf32>
    %68 = arith.select %5, %67, %65 : vector<1x128xi1>, vector<1x128xf32>
    %c0_25 = arith.constant 0 : index
    %c5_26 = arith.constant 5 : index
    %c0_27 = arith.constant 0 : index
    %c0_28 = arith.constant 0 : index
    %69 = vector.load %arg4[%c0_25, %c5_26, %c0_27, %c0_28] : memref<1x26x1x128xf32, #tpu.memory_space<vmem>>, vector<1x1x1x128xf32>
    %70 = vector.shape_cast %69 : vector<1x1x1x128xf32> to vector<1x128xf32>
    %71 = vector.shape_cast %68 : vector<1x128xf32> to vector<1x1x1x128xf32>
    tpu.vector_store %arg4[%c0_25, %c5_26, %c0_27, %c0_28], %71 {strides = array<i32>} : memref<1x26x1x128xf32, #tpu.memory_space<vmem>>, vector<1x1x1x128xf32>,
    %c6 = arith.constant 6 : index
    %72 = memref.load %arg2[%c6] : memref<192xf32, #tpu.memory_space<smem>>
    %73 = vector.broadcast %72 : f32 to vector<1x128xf32>
    %c14 = arith.constant 14 : index
    %74 = memref.load %arg2[%c14] : memref<192xf32, #tpu.memory_space<smem>>
    %75 = vector.broadcast %74 : f32 to vector<1x128xf32>
    %76 = arith.select %3, %75, %73 : vector<1x128xi1>, vector<1x128xf32>
    %c22 = arith.constant 22 : index
    %77 = memref.load %arg2[%c22] : memref<192xf32, #tpu.memory_space<smem>>
    %78 = vector.broadcast %77 : f32 to vector<1x128xf32>
    %79 = arith.select %5, %78, %76 : vector<1x128xi1>, vector<1x128xf32>
    %c0_29 = arith.constant 0 : index
    %c6_30 = arith.constant 6 : index
    %c0_31 = arith.constant 0 : index
    %c0_32 = arith.constant 0 : index
    %80 = vector.load %arg4[%c0_29, %c6_30, %c0_31, %c0_32] : memref<1x26x1x128xf32, #tpu.memory_space<vmem>>, vector<1x1x1x128xf32>
    %81 = vector.shape_cast %80 : vector<1x1x1x128xf32> to vector<1x128xf32>
    %82 = vector.shape_cast %79 : vector<1x128xf32> to vector<1x1x1x128xf32>
    tpu.vector_store %arg4[%c0_29, %c6_30, %c0_31, %c0_32], %82 {strides = array<i32>} : memref<1x26x1x128xf32, #tpu.memory_space<vmem>>, vector<1x1x1x128xf32>,
    %c7 = arith.constant 7 : index
    %83 = memref.load %arg2[%c7] : memref<192xf32, #tpu.memory_space<smem>>
    %84 = vector.broadcast %83 : f32 to vector<1x128xf32>
    %c15 = arith.constant 15 : index
    %85 = memref.load %arg2[%c15] : memref<192xf32, #tpu.memory_space<smem>>
    %86 = vector.broadcast %85 : f32 to vector<1x128xf32>
    %87 = arith.select %3, %86, %84 : vector<1x128xi1>, vector<1x128xf32>
    %c23 = arith.constant 23 : index
    %88 = memref.load %arg2[%c23] : memref<192xf32, #tpu.memory_space<smem>>
    %89 = vector.broadcast %88 : f32 to vector<1x128xf32>
    %90 = arith.select %5, %89, %87 : vector<1x128xi1>, vector<1x128xf32>
    %c0_33 = arith.constant 0 : index
    %c7_34 = arith.constant 7 : index
    %c0_35 = arith.constant 0 : index
    %c0_36 = arith.constant 0 : index
    %91 = vector.load %arg4[%c0_33, %c7_34, %c0_35, %c0_36] : memref<1x26x1x128xf32, #tpu.memory_space<vmem>>, vector<1x1x1x128xf32>
    %92 = vector.shape_cast %91 : vector<1x1x1x128xf32> to vector<1x128xf32>
    %93 = vector.shape_cast %90 : vector<1x128xf32> to vector<1x1x1x128xf32>
    tpu.vector_store %arg4[%c0_33, %c7_34, %c0_35, %c0_36], %93 {strides = array<i32>} : memref<1x26x1x128xf32, #tpu.memory_space<vmem>>, vector<1x1x1x128xf32>,
    %c0_37 = arith.constant 0 : index
    %c1_38 = arith.constant 1 : index
    %c0_39 = arith.constant 0 : index
    %c0_40 = arith.constant 0 : index
    %94 = vector.load %arg3[%c0_37, %c1_38, %c0_39, %c0_40] : memref<1x5x1x128xf32, #tpu.memory_space<vmem>>, vector<1x1x1x128xf32>
    %95 = vector.shape_cast %94 : vector<1x1x1x128xf32> to vector<1x128xf32>
    %cst_41 = arith.constant 1.000000e+00 : f32
    %96 = vector.broadcast %cst_41 : f32 to vector<1x128xf32>
    %97 = arith.cmpf oeq, %95, %96 : vector<1x128xf32>
    %cst_42 = arith.constant 2.000000e+00 : f32
    %98 = vector.broadcast %cst_42 : f32 to vector<1x128xf32>
    %99 = arith.cmpf oeq, %95, %98 : vector<1x128xf32>
    %cst_43 = arith.constant 3.000000e+00 : f32
    %100 = vector.broadcast %cst_43 : f32 to vector<1x128xf32>
    %101 = arith.cmpf oeq, %95, %100 : vector<1x128xf32>
    %cst_44 = arith.constant 4.000000e+00 : f32
    %102 = vector.broadcast %cst_44 : f32 to vector<1x128xf32>
    %103 = arith.cmpf oeq, %95, %102 : vector<1x128xf32>
    %cst_45 = arith.constant 5.000000e+00 : f32
    %104 = vector.broadcast %cst_45 : f32 to vector<1x128xf32>
    %105 = arith.cmpf oeq, %95, %104 : vector<1x128xf32>
    %cst_46 = arith.constant 6.000000e+00 : f32
    %106 = vector.broadcast %cst_46 : f32 to vector<1x128xf32>
    %107 = arith.cmpf oeq, %95, %106 : vector<1x128xf32>
    %cst_47 = arith.constant 7.000000e+00 : f32
    %108 = vector.broadcast %cst_47 : f32 to vector<1x128xf32>
    %109 = arith.cmpf oeq, %95, %108 : vector<1x128xf32>
    %cst_48 = arith.constant 8.000000e+00 : f32
    %110 = vector.broadcast %cst_48 : f32 to vector<1x128xf32>
    %111 = arith.cmpf oeq, %95, %110 : vector<1x128xf32>
    %cst_49 = arith.constant 9.000000e+00 : f32
    %112 = vector.broadcast %cst_49 : f32 to vector<1x128xf32>
    %113 = arith.cmpf oeq, %95, %112 : vector<1x128xf32>
    %cst_50 = arith.constant 1.000000e+01 : f32
    %114 = vector.broadcast %cst_50 : f32 to vector<1x128xf32>
    %115 = arith.cmpf oeq, %95, %114 : vector<1x128xf32>
    %cst_51 = arith.constant 1.100000e+01 : f32
    %116 = vector.broadcast %cst_51 : f32 to vector<1x128xf32>
    %117 = arith.cmpf oeq, %95, %116 : vector<1x128xf32>
    %cst_52 = arith.constant 1.200000e+01 : f32
    %118 = vector.broadcast %cst_52 : f32 to vector<1x128xf32>
    %119 = arith.cmpf oeq, %95, %118 : vector<1x128xf32>
    %c24 = arith.constant 24 : index
    %120 = memref.load %arg2[%c24] : memref<192xf32, #tpu.memory_space<smem>>
    %121 = vector.broadcast %120 : f32 to vector<1x128xf32>
    %c32 = arith.constant 32 : index
    %122 = memref.load %arg2[%c32] : memref<192xf32, #tpu.memory_space<smem>>
    %123 = vector.broadcast %122 : f32 to vector<1x128xf32>
    %124 = arith.select %97, %123, %121 : vector<1x128xi1>, vector<1x128xf32>
    %c40 = arith.constant 40 : index
    %125 = memref.load %arg2[%c40] : memref<192xf32, #tpu.memory_space<smem>>
    %126 = vector.broadcast %125 : f32 to vector<1x128xf32>
    %127 = arith.select %99, %126, %124 : vector<1x128xi1>, vector<1x128xf32>
    %c48 = arith.constant 48 : index
    %128 = memref.load %arg2[%c48] : memref<192xf32, #tpu.memory_space<smem>>
    %129 = vector.broadcast %128 : f32 to vector<1x128xf32>
    %130 = arith.select %101, %129, %127 : vector<1x128xi1>, vector<1x128xf32>
    %c56 = arith.constant 56 : index
    %131 = memref.load %arg2[%c56] : memref<192xf32, #tpu.memory_space<smem>>
    %132 = vector.broadcast %131 : f32 to vector<1x128xf32>
    %133 = arith.select %103, %132, %130 : vector<1x128xi1>, vector<1x128xf32>
    %c64 = arith.constant 64 : index
    %134 = memref.load %arg2[%c64] : memref<192xf32, #tpu.memory_space<smem>>
    %135 = vector.broadcast %134 : f32 to vector<1x128xf32>
    %136 = arith.select %105, %135, %133 : vector<1x128xi1>, vector<1x128xf32>
    %c72 = arith.constant 72 : index
    %137 = memref.load %arg2[%c72] : memref<192xf32, #tpu.memory_space<smem>>
    %138 = vector.broadcast %137 : f32 to vector<1x128xf32>
    %139 = arith.select %107, %138, %136 : vector<1x128xi1>, vector<1x128xf32>
    %c80 = arith.constant 80 : index
    %140 = memref.load %arg2[%c80] : memref<192xf32, #tpu.memory_space<smem>>
    %141 = vector.broadcast %140 : f32 to vector<1x128xf32>
    %142 = arith.select %109, %141, %139 : vector<1x128xi1>, vector<1x128xf32>
    %c88 = arith.constant 88 : index
    %143 = memref.load %arg2[%c88] : memref<192xf32, #tpu.memory_space<smem>>
    %144 = vector.broadcast %143 : f32 to vector<1x128xf32>
    %145 = arith.select %111, %144, %142 : vector<1x128xi1>, vector<1x128xf32>
    %c96 = arith.constant 96 : index
    %146 = memref.load %arg2[%c96] : memref<192xf32, #tpu.memory_space<smem>>
    %147 = vector.broadcast %146 : f32 to vector<1x128xf32>
    %148 = arith.select %113, %147, %145 : vector<1x128xi1>, vector<1x128xf32>
    %c104 = arith.constant 104 : index
    %149 = memref.load %arg2[%c104] : memref<192xf32, #tpu.memory_space<smem>>
    %150 = vector.broadcast %149 : f32 to vector<1x128xf32>
    %151 = arith.select %115, %150, %148 : vector<1x128xi1>, vector<1x128xf32>
    %c112 = arith.constant 112 : index
    %152 = memref.load %arg2[%c112] : memref<192xf32, #tpu.memory_space<smem>>
    %153 = vector.broadcast %152 : f32 to vector<1x128xf32>
    %154 = arith.select %117, %153, %151 : vector<1x128xi1>, vector<1x128xf32>
    %c120 = arith.constant 120 : index
    %155 = memref.load %arg2[%c120] : memref<192xf32, #tpu.memory_space<smem>>
    %156 = vector.broadcast %155 : f32 to vector<1x128xf32>
    %157 = arith.select %119, %156, %154 : vector<1x128xi1>, vector<1x128xf32>
    %c0_53 = arith.constant 0 : index
    %c8_54 = arith.constant 8 : index
    %c0_55 = arith.constant 0 : index
    %c0_56 = arith.constant 0 : index
    %158 = vector.load %arg4[%c0_53, %c8_54, %c0_55, %c0_56] : memref<1x26x1x128xf32, #tpu.memory_space<vmem>>, vector<1x1x1x128xf32>
    %159 = vector.shape_cast %158 : vector<1x1x1x128xf32> to vector<1x128xf32>
    %160 = vector.shape_cast %157 : vector<1x128xf32> to vector<1x1x1x128xf32>
    tpu.vector_store %arg4[%c0_53, %c8_54, %c0_55, %c0_56], %160 {strides = array<i32>} : memref<1x26x1x128xf32, #tpu.memory_space<vmem>>, vector<1x1x1x128xf32>,
    %c25 = arith.constant 25 : index
    %161 = memref.load %arg2[%c25] : memref<192xf32, #tpu.memory_space<smem>>
    %162 = vector.broadcast %161 : f32 to vector<1x128xf32>
    %c33 = arith.constant 33 : index
    %163 = memref.load %arg2[%c33] : memref<192xf32, #tpu.memory_space<smem>>
    %164 = vector.broadcast %163 : f32 to vector<1x128xf32>
    %165 = arith.select %97, %164, %162 : vector<1x128xi1>, vector<1x128xf32>
    %c41 = arith.constant 41 : index
    %166 = memref.load %arg2[%c41] : memref<192xf32, #tpu.memory_space<smem>>
    %167 = vector.broadcast %166 : f32 to vector<1x128xf32>
    %168 = arith.select %99, %167, %165 : vector<1x128xi1>, vector<1x128xf32>
    %c49 = arith.constant 49 : index
    %169 = memref.load %arg2[%c49] : memref<192xf32, #tpu.memory_space<smem>>
    %170 = vector.broadcast %169 : f32 to vector<1x128xf32>
    %171 = arith.select %101, %170, %168 : vector<1x128xi1>, vector<1x128xf32>
    %c57 = arith.constant 57 : index
    %172 = memref.load %arg2[%c57] : memref<192xf32, #tpu.memory_space<smem>>
    %173 = vector.broadcast %172 : f32 to vector<1x128xf32>
    %174 = arith.select %103, %173, %171 : vector<1x128xi1>, vector<1x128xf32>
    %c65 = arith.constant 65 : index
    %175 = memref.load %arg2[%c65] : memref<192xf32, #tpu.memory_space<smem>>
    %176 = vector.broadcast %175 : f32 to vector<1x128xf32>
    %177 = arith.select %105, %176, %174 : vector<1x128xi1>, vector<1x128xf32>
    %c73 = arith.constant 73 : index
    %178 = memref.load %arg2[%c73] : memref<192xf32, #tpu.memory_space<smem>>
    %179 = vector.broadcast %178 : f32 to vector<1x128xf32>
    %180 = arith.select %107, %179, %177 : vector<1x128xi1>, vector<1x128xf32>
    %c81 = arith.constant 81 : index
    %181 = memref.load %arg2[%c81] : memref<192xf32, #tpu.memory_space<smem>>
    %182 = vector.broadcast %181 : f32 to vector<1x128xf32>
    %183 = arith.select %109, %182, %180 : vector<1x128xi1>, vector<1x128xf32>
    %c89 = arith.constant 89 : index
    %184 = memref.load %arg2[%c89] : memref<192xf32, #tpu.memory_space<smem>>
    %185 = vector.broadcast %184 : f32 to vector<1x128xf32>
    %186 = arith.select %111, %185, %183 : vector<1x128xi1>, vector<1x128xf32>
    %c97 = arith.constant 97 : index
    %187 = memref.load %arg2[%c97] : memref<192xf32, #tpu.memory_space<smem>>
    %188 = vector.broadcast %187 : f32 to vector<1x128xf32>
    %189 = arith.select %113, %188, %186 : vector<1x128xi1>, vector<1x128xf32>
    %c105 = arith.constant 105 : index
    %190 = memref.load %arg2[%c105] : memref<192xf32, #tpu.memory_space<smem>>
    %191 = vector.broadcast %190 : f32 to vector<1x128xf32>
    %192 = arith.select %115, %191, %189 : vector<1x128xi1>, vector<1x128xf32>
    %c113 = arith.constant 113 : index
    %193 = memref.load %arg2[%c113] : memref<192xf32, #tpu.memory_space<smem>>
    %194 = vector.broadcast %193 : f32 to vector<1x128xf32>
    %195 = arith.select %117, %194, %192 : vector<1x128xi1>, vector<1x128xf32>
    %c121 = arith.constant 121 : index
    %196 = memref.load %arg2[%c121] : memref<192xf32, #tpu.memory_space<smem>>
    %197 = vector.broadcast %196 : f32 to vector<1x128xf32>
    %198 = arith.select %119, %197, %195 : vector<1x128xi1>, vector<1x128xf32>
    %c0_57 = arith.constant 0 : index
    %c9_58 = arith.constant 9 : index
    %c0_59 = arith.constant 0 : index
    %c0_60 = arith.constant 0 : index
    %199 = vector.load %arg4[%c0_57, %c9_58, %c0_59, %c0_60] : memref<1x26x1x128xf32, #tpu.memory_space<vmem>>, vector<1x1x1x128xf32>
    %200 = vector.shape_cast %199 : vector<1x1x1x128xf32> to vector<1x128xf32>
    %201 = vector.shape_cast %198 : vector<1x128xf32> to vector<1x1x1x128xf32>
    tpu.vector_store %arg4[%c0_57, %c9_58, %c0_59, %c0_60], %201 {strides = array<i32>} : memref<1x26x1x128xf32, #tpu.memory_space<vmem>>, vector<1x1x1x128xf32>,
    %c26 = arith.constant 26 : index
    %202 = memref.load %arg2[%c26] : memref<192xf32, #tpu.memory_space<smem>>
    %203 = vector.broadcast %202 : f32 to vector<1x128xf32>
    %c34 = arith.constant 34 : index
    %204 = memref.load %arg2[%c34] : memref<192xf32, #tpu.memory_space<smem>>
    %205 = vector.broadcast %204 : f32 to vector<1x128xf32>
    %206 = arith.select %97, %205, %203 : vector<1x128xi1>, vector<1x128xf32>
    %c42 = arith.constant 42 : index
    %207 = memref.load %arg2[%c42] : memref<192xf32, #tpu.memory_space<smem>>
    %208 = vector.broadcast %207 : f32 to vector<1x128xf32>
    %209 = arith.select %99, %208, %206 : vector<1x128xi1>, vector<1x128xf32>
    %c50 = arith.constant 50 : index
    %210 = memref.load %arg2[%c50] : memref<192xf32, #tpu.memory_space<smem>>
    %211 = vector.broadcast %210 : f32 to vector<1x128xf32>
    %212 = arith.select %101, %211, %209 : vector<1x128xi1>, vector<1x128xf32>
    %c58 = arith.constant 58 : index
    %213 = memref.load %arg2[%c58] : memref<192xf32, #tpu.memory_space<smem>>
    %214 = vector.broadcast %213 : f32 to vector<1x128xf32>
    %215 = arith.select %103, %214, %212 : vector<1x128xi1>, vector<1x128xf32>
    %c66 = arith.constant 66 : index
    %216 = memref.load %arg2[%c66] : memref<192xf32, #tpu.memory_space<smem>>
    %217 = vector.broadcast %216 : f32 to vector<1x128xf32>
    %218 = arith.select %105, %217, %215 : vector<1x128xi1>, vector<1x128xf32>
    %c74 = arith.constant 74 : index
    %219 = memref.load %arg2[%c74] : memref<192xf32, #tpu.memory_space<smem>>
    %220 = vector.broadcast %219 : f32 to vector<1x128xf32>
    %221 = arith.select %107, %220, %218 : vector<1x128xi1>, vector<1x128xf32>
    %c82 = arith.constant 82 : index
    %222 = memref.load %arg2[%c82] : memref<192xf32, #tpu.memory_space<smem>>
    %223 = vector.broadcast %222 : f32 to vector<1x128xf32>
    %224 = arith.select %109, %223, %221 : vector<1x128xi1>, vector<1x128xf32>
    %c90 = arith.constant 90 : index
    %225 = memref.load %arg2[%c90] : memref<192xf32, #tpu.memory_space<smem>>
    %226 = vector.broadcast %225 : f32 to vector<1x128xf32>
    %227 = arith.select %111, %226, %224 : vector<1x128xi1>, vector<1x128xf32>
    %c98 = arith.constant 98 : index
    %228 = memref.load %arg2[%c98] : memref<192xf32, #tpu.memory_space<smem>>
    %229 = vector.broadcast %228 : f32 to vector<1x128xf32>
    %230 = arith.select %113, %229, %227 : vector<1x128xi1>, vector<1x128xf32>
    %c106 = arith.constant 106 : index
    %231 = memref.load %arg2[%c106] : memref<192xf32, #tpu.memory_space<smem>>
    %232 = vector.broadcast %231 : f32 to vector<1x128xf32>
    %233 = arith.select %115, %232, %230 : vector<1x128xi1>, vector<1x128xf32>
    %c114 = arith.constant 114 : index
    %234 = memref.load %arg2[%c114] : memref<192xf32, #tpu.memory_space<smem>>
    %235 = vector.broadcast %234 : f32 to vector<1x128xf32>
    %236 = arith.select %117, %235, %233 : vector<1x128xi1>, vector<1x128xf32>
    %c122 = arith.constant 122 : index
    %237 = memref.load %arg2[%c122] : memref<192xf32, #tpu.memory_space<smem>>
    %238 = vector.broadcast %237 : f32 to vector<1x128xf32>
    %239 = arith.select %119, %238, %236 : vector<1x128xi1>, vector<1x128xf32>
    %c0_61 = arith.constant 0 : index
    %c10_62 = arith.constant 10 : index
    %c0_63 = arith.constant 0 : index
    %c0_64 = arith.constant 0 : index
    %240 = vector.load %arg4[%c0_61, %c10_62, %c0_63, %c0_64] : memref<1x26x1x128xf32, #tpu.memory_space<vmem>>, vector<1x1x1x128xf32>
    %241 = vector.shape_cast %240 : vector<1x1x1x128xf32> to vector<1x128xf32>
    %242 = vector.shape_cast %239 : vector<1x128xf32> to vector<1x1x1x128xf32>
    tpu.vector_store %arg4[%c0_61, %c10_62, %c0_63, %c0_64], %242 {strides = array<i32>} : memref<1x26x1x128xf32, #tpu.memory_space<vmem>>, vector<1x1x1x128xf32>,
    %c27 = arith.constant 27 : index
    %243 = memref.load %arg2[%c27] : memref<192xf32, #tpu.memory_space<smem>>
    %244 = vector.broadcast %243 : f32 to vector<1x128xf32>
    %c35 = arith.constant 35 : index
    %245 = memref.load %arg2[%c35] : memref<192xf32, #tpu.memory_space<smem>>
    %246 = vector.broadcast %245 : f32 to vector<1x128xf32>
    %247 = arith.select %97, %246, %244 : vector<1x128xi1>, vector<1x128xf32>
    %c43 = arith.constant 43 : index
    %248 = memref.load %arg2[%c43] : memref<192xf32, #tpu.memory_space<smem>>
    %249 = vector.broadcast %248 : f32 to vector<1x128xf32>
    %250 = arith.select %99, %249, %247 : vector<1x128xi1>, vector<1x128xf32>
    %c51 = arith.constant 51 : index
    %251 = memref.load %arg2[%c51] : memref<192xf32, #tpu.memory_space<smem>>
    %252 = vector.broadcast %251 : f32 to vector<1x128xf32>
    %253 = arith.select %101, %252, %250 : vector<1x128xi1>, vector<1x128xf32>
    %c59 = arith.constant 59 : index
    %254 = memref.load %arg2[%c59] : memref<192xf32, #tpu.memory_space<smem>>
    %255 = vector.broadcast %254 : f32 to vector<1x128xf32>
    %256 = arith.select %103, %255, %253 : vector<1x128xi1>, vector<1x128xf32>
    %c67 = arith.constant 67 : index
    %257 = memref.load %arg2[%c67] : memref<192xf32, #tpu.memory_space<smem>>
    %258 = vector.broadcast %257 : f32 to vector<1x128xf32>
    %259 = arith.select %105, %258, %256 : vector<1x128xi1>, vector<1x128xf32>
    %c75 = arith.constant 75 : index
    %260 = memref.load %arg2[%c75] : memref<192xf32, #tpu.memory_space<smem>>
    %261 = vector.broadcast %260 : f32 to vector<1x128xf32>
    %262 = arith.select %107, %261, %259 : vector<1x128xi1>, vector<1x128xf32>
    %c83 = arith.constant 83 : index
    %263 = memref.load %arg2[%c83] : memref<192xf32, #tpu.memory_space<smem>>
    %264 = vector.broadcast %263 : f32 to vector<1x128xf32>
    %265 = arith.select %109, %264, %262 : vector<1x128xi1>, vector<1x128xf32>
    %c91 = arith.constant 91 : index
    %266 = memref.load %arg2[%c91] : memref<192xf32, #tpu.memory_space<smem>>
    %267 = vector.broadcast %266 : f32 to vector<1x128xf32>
    %268 = arith.select %111, %267, %265 : vector<1x128xi1>, vector<1x128xf32>
    %c99 = arith.constant 99 : index
    %269 = memref.load %arg2[%c99] : memref<192xf32, #tpu.memory_space<smem>>
    %270 = vector.broadcast %269 : f32 to vector<1x128xf32>
    %271 = arith.select %113, %270, %268 : vector<1x128xi1>, vector<1x128xf32>
    %c107 = arith.constant 107 : index
    %272 = memref.load %arg2[%c107] : memref<192xf32, #tpu.memory_space<smem>>
    %273 = vector.broadcast %272 : f32 to vector<1x128xf32>
    %274 = arith.select %115, %273, %271 : vector<1x128xi1>, vector<1x128xf32>
    %c115 = arith.constant 115 : index
    %275 = memref.load %arg2[%c115] : memref<192xf32, #tpu.memory_space<smem>>
    %276 = vector.broadcast %275 : f32 to vector<1x128xf32>
    %277 = arith.select %117, %276, %274 : vector<1x128xi1>, vector<1x128xf32>
    %c123 = arith.constant 123 : index
    %278 = memref.load %arg2[%c123] : memref<192xf32, #tpu.memory_space<smem>>
    %279 = vector.broadcast %278 : f32 to vector<1x128xf32>
    %280 = arith.select %119, %279, %277 : vector<1x128xi1>, vector<1x128xf32>
    %c0_65 = arith.constant 0 : index
    %c11_66 = arith.constant 11 : index
    %c0_67 = arith.constant 0 : index
    %c0_68 = arith.constant 0 : index
    %281 = vector.load %arg4[%c0_65, %c11_66, %c0_67, %c0_68] : memref<1x26x1x128xf32, #tpu.memory_space<vmem>>, vector<1x1x1x128xf32>
    %282 = vector.shape_cast %281 : vector<1x1x1x128xf32> to vector<1x128xf32>
    %283 = vector.shape_cast %280 : vector<1x128xf32> to vector<1x1x1x128xf32>
    tpu.vector_store %arg4[%c0_65, %c11_66, %c0_67, %c0_68], %283 {strides = array<i32>} : memref<1x26x1x128xf32, #tpu.memory_space<vmem>>, vector<1x1x1x128xf32>,
    %c28 = arith.constant 28 : index
    %284 = memref.load %arg2[%c28] : memref<192xf32, #tpu.memory_space<smem>>
    %285 = vector.broadcast %284 : f32 to vector<1x128xf32>
    %c36 = arith.constant 36 : index
    %286 = memref.load %arg2[%c36] : memref<192xf32, #tpu.memory_space<smem>>
    %287 = vector.broadcast %286 : f32 to vector<1x128xf32>
    %288 = arith.select %97, %287, %285 : vector<1x128xi1>, vector<1x128xf32>
    %c44 = arith.constant 44 : index
    %289 = memref.load %arg2[%c44] : memref<192xf32, #tpu.memory_space<smem>>
    %290 = vector.broadcast %289 : f32 to vector<1x128xf32>
    %291 = arith.select %99, %290, %288 : vector<1x128xi1>, vector<1x128xf32>
    %c52 = arith.constant 52 : index
    %292 = memref.load %arg2[%c52] : memref<192xf32, #tpu.memory_space<smem>>
    %293 = vector.broadcast %292 : f32 to vector<1x128xf32>
    %294 = arith.select %101, %293, %291 : vector<1x128xi1>, vector<1x128xf32>
    %c60 = arith.constant 60 : index
    %295 = memref.load %arg2[%c60] : memref<192xf32, #tpu.memory_space<smem>>
    %296 = vector.broadcast %295 : f32 to vector<1x128xf32>
    %297 = arith.select %103, %296, %294 : vector<1x128xi1>, vector<1x128xf32>
    %c68 = arith.constant 68 : index
    %298 = memref.load %arg2[%c68] : memref<192xf32, #tpu.memory_space<smem>>
    %299 = vector.broadcast %298 : f32 to vector<1x128xf32>
    %300 = arith.select %105, %299, %297 : vector<1x128xi1>, vector<1x128xf32>
    %c76 = arith.constant 76 : index
    %301 = memref.load %arg2[%c76] : memref<192xf32, #tpu.memory_space<smem>>
    %302 = vector.broadcast %301 : f32 to vector<1x128xf32>
    %303 = arith.select %107, %302, %300 : vector<1x128xi1>, vector<1x128xf32>
    %c84 = arith.constant 84 : index
    %304 = memref.load %arg2[%c84] : memref<192xf32, #tpu.memory_space<smem>>
    %305 = vector.broadcast %304 : f32 to vector<1x128xf32>
    %306 = arith.select %109, %305, %303 : vector<1x128xi1>, vector<1x128xf32>
    %c92 = arith.constant 92 : index
    %307 = memref.load %arg2[%c92] : memref<192xf32, #tpu.memory_space<smem>>
    %308 = vector.broadcast %307 : f32 to vector<1x128xf32>
    %309 = arith.select %111, %308, %306 : vector<1x128xi1>, vector<1x128xf32>
    %c100 = arith.constant 100 : index
    %310 = memref.load %arg2[%c100] : memref<192xf32, #tpu.memory_space<smem>>
    %311 = vector.broadcast %310 : f32 to vector<1x128xf32>
    %312 = arith.select %113, %311, %309 : vector<1x128xi1>, vector<1x128xf32>
    %c108 = arith.constant 108 : index
    %313 = memref.load %arg2[%c108] : memref<192xf32, #tpu.memory_space<smem>>
    %314 = vector.broadcast %313 : f32 to vector<1x128xf32>
    %315 = arith.select %115, %314, %312 : vector<1x128xi1>, vector<1x128xf32>
    %c116 = arith.constant 116 : index
    %316 = memref.load %arg2[%c116] : memref<192xf32, #tpu.memory_space<smem>>
    %317 = vector.broadcast %316 : f32 to vector<1x128xf32>
    %318 = arith.select %117, %317, %315 : vector<1x128xi1>, vector<1x128xf32>
    %c124 = arith.constant 124 : index
    %319 = memref.load %arg2[%c124] : memref<192xf32, #tpu.memory_space<smem>>
    %320 = vector.broadcast %319 : f32 to vector<1x128xf32>
    %321 = arith.select %119, %320, %318 : vector<1x128xi1>, vector<1x128xf32>
    %c0_69 = arith.constant 0 : index
    %c12_70 = arith.constant 12 : index
    %c0_71 = arith.constant 0 : index
    %c0_72 = arith.constant 0 : index
    %322 = vector.load %arg4[%c0_69, %c12_70, %c0_71, %c0_72] : memref<1x26x1x128xf32, #tpu.memory_space<vmem>>, vector<1x1x1x128xf32>
    %323 = vector.shape_cast %322 : vector<1x1x1x128xf32> to vector<1x128xf32>
    %324 = vector.shape_cast %321 : vector<1x128xf32> to vector<1x1x1x128xf32>
    tpu.vector_store %arg4[%c0_69, %c12_70, %c0_71, %c0_72], %324 {strides = array<i32>} : memref<1x26x1x128xf32, #tpu.memory_space<vmem>>, vector<1x1x1x128xf32>,
    %c29 = arith.constant 29 : index
    %325 = memref.load %arg2[%c29] : memref<192xf32, #tpu.memory_space<smem>>
    %326 = vector.broadcast %325 : f32 to vector<1x128xf32>
    %c37 = arith.constant 37 : index
    %327 = memref.load %arg2[%c37] : memref<192xf32, #tpu.memory_space<smem>>
    %328 = vector.broadcast %327 : f32 to vector<1x128xf32>
    %329 = arith.select %97, %328, %326 : vector<1x128xi1>, vector<1x128xf32>
    %c45 = arith.constant 45 : index
    %330 = memref.load %arg2[%c45] : memref<192xf32, #tpu.memory_space<smem>>
    %331 = vector.broadcast %330 : f32 to vector<1x128xf32>
    %332 = arith.select %99, %331, %329 : vector<1x128xi1>, vector<1x128xf32>
    %c53 = arith.constant 53 : index
    %333 = memref.load %arg2[%c53] : memref<192xf32, #tpu.memory_space<smem>>
    %334 = vector.broadcast %333 : f32 to vector<1x128xf32>
    %335 = arith.select %101, %334, %332 : vector<1x128xi1>, vector<1x128xf32>
    %c61 = arith.constant 61 : index
    %336 = memref.load %arg2[%c61] : memref<192xf32, #tpu.memory_space<smem>>
    %337 = vector.broadcast %336 : f32 to vector<1x128xf32>
    %338 = arith.select %103, %337, %335 : vector<1x128xi1>, vector<1x128xf32>
    %c69 = arith.constant 69 : index
    %339 = memref.load %arg2[%c69] : memref<192xf32, #tpu.memory_space<smem>>
    %340 = vector.broadcast %339 : f32 to vector<1x128xf32>
    %341 = arith.select %105, %340, %338 : vector<1x128xi1>, vector<1x128xf32>
    %c77 = arith.constant 77 : index
    %342 = memref.load %arg2[%c77] : memref<192xf32, #tpu.memory_space<smem>>
    %343 = vector.broadcast %342 : f32 to vector<1x128xf32>
    %344 = arith.select %107, %343, %341 : vector<1x128xi1>, vector<1x128xf32>
    %c85 = arith.constant 85 : index
    %345 = memref.load %arg2[%c85] : memref<192xf32, #tpu.memory_space<smem>>
    %346 = vector.broadcast %345 : f32 to vector<1x128xf32>
    %347 = arith.select %109, %346, %344 : vector<1x128xi1>, vector<1x128xf32>
    %c93 = arith.constant 93 : index
    %348 = memref.load %arg2[%c93] : memref<192xf32, #tpu.memory_space<smem>>
    %349 = vector.broadcast %348 : f32 to vector<1x128xf32>
    %350 = arith.select %111, %349, %347 : vector<1x128xi1>, vector<1x128xf32>
    %c101 = arith.constant 101 : index
    %351 = memref.load %arg2[%c101] : memref<192xf32, #tpu.memory_space<smem>>
    %352 = vector.broadcast %351 : f32 to vector<1x128xf32>
    %353 = arith.select %113, %352, %350 : vector<1x128xi1>, vector<1x128xf32>
    %c109 = arith.constant 109 : index
    %354 = memref.load %arg2[%c109] : memref<192xf32, #tpu.memory_space<smem>>
    %355 = vector.broadcast %354 : f32 to vector<1x128xf32>
    %356 = arith.select %115, %355, %353 : vector<1x128xi1>, vector<1x128xf32>
    %c117 = arith.constant 117 : index
    %357 = memref.load %arg2[%c117] : memref<192xf32, #tpu.memory_space<smem>>
    %358 = vector.broadcast %357 : f32 to vector<1x128xf32>
    %359 = arith.select %117, %358, %356 : vector<1x128xi1>, vector<1x128xf32>
    %c125 = arith.constant 125 : index
    %360 = memref.load %arg2[%c125] : memref<192xf32, #tpu.memory_space<smem>>
    %361 = vector.broadcast %360 : f32 to vector<1x128xf32>
    %362 = arith.select %119, %361, %359 : vector<1x128xi1>, vector<1x128xf32>
    %c0_73 = arith.constant 0 : index
    %c13_74 = arith.constant 13 : index
    %c0_75 = arith.constant 0 : index
    %c0_76 = arith.constant 0 : index
    %363 = vector.load %arg4[%c0_73, %c13_74, %c0_75, %c0_76] : memref<1x26x1x128xf32, #tpu.memory_space<vmem>>, vector<1x1x1x128xf32>
    %364 = vector.shape_cast %363 : vector<1x1x1x128xf32> to vector<1x128xf32>
    %365 = vector.shape_cast %362 : vector<1x128xf32> to vector<1x1x1x128xf32>
    tpu.vector_store %arg4[%c0_73, %c13_74, %c0_75, %c0_76], %365 {strides = array<i32>} : memref<1x26x1x128xf32, #tpu.memory_space<vmem>>, vector<1x1x1x128xf32>,
    %c30 = arith.constant 30 : index
    %366 = memref.load %arg2[%c30] : memref<192xf32, #tpu.memory_space<smem>>
    %367 = vector.broadcast %366 : f32 to vector<1x128xf32>
    %c38 = arith.constant 38 : index
    %368 = memref.load %arg2[%c38] : memref<192xf32, #tpu.memory_space<smem>>
    %369 = vector.broadcast %368 : f32 to vector<1x128xf32>
    %370 = arith.select %97, %369, %367 : vector<1x128xi1>, vector<1x128xf32>
    %c46 = arith.constant 46 : index
    %371 = memref.load %arg2[%c46] : memref<192xf32, #tpu.memory_space<smem>>
    %372 = vector.broadcast %371 : f32 to vector<1x128xf32>
    %373 = arith.select %99, %372, %370 : vector<1x128xi1>, vector<1x128xf32>
    %c54 = arith.constant 54 : index
    %374 = memref.load %arg2[%c54] : memref<192xf32, #tpu.memory_space<smem>>
    %375 = vector.broadcast %374 : f32 to vector<1x128xf32>
    %376 = arith.select %101, %375, %373 : vector<1x128xi1>, vector<1x128xf32>
    %c62 = arith.constant 62 : index
    %377 = memref.load %arg2[%c62] : memref<192xf32, #tpu.memory_space<smem>>
    %378 = vector.broadcast %377 : f32 to vector<1x128xf32>
    %379 = arith.select %103, %378, %376 : vector<1x128xi1>, vector<1x128xf32>
    %c70 = arith.constant 70 : index
    %380 = memref.load %arg2[%c70] : memref<192xf32, #tpu.memory_space<smem>>
    %381 = vector.broadcast %380 : f32 to vector<1x128xf32>
    %382 = arith.select %105, %381, %379 : vector<1x128xi1>, vector<1x128xf32>
    %c78 = arith.constant 78 : index
    %383 = memref.load %arg2[%c78] : memref<192xf32, #tpu.memory_space<smem>>
    %384 = vector.broadcast %383 : f32 to vector<1x128xf32>
    %385 = arith.select %107, %384, %382 : vector<1x128xi1>, vector<1x128xf32>
    %c86 = arith.constant 86 : index
    %386 = memref.load %arg2[%c86] : memref<192xf32, #tpu.memory_space<smem>>
    %387 = vector.broadcast %386 : f32 to vector<1x128xf32>
    %388 = arith.select %109, %387, %385 : vector<1x128xi1>, vector<1x128xf32>
    %c94 = arith.constant 94 : index
    %389 = memref.load %arg2[%c94] : memref<192xf32, #tpu.memory_space<smem>>
    %390 = vector.broadcast %389 : f32 to vector<1x128xf32>
    %391 = arith.select %111, %390, %388 : vector<1x128xi1>, vector<1x128xf32>
    %c102 = arith.constant 102 : index
    %392 = memref.load %arg2[%c102] : memref<192xf32, #tpu.memory_space<smem>>
    %393 = vector.broadcast %392 : f32 to vector<1x128xf32>
    %394 = arith.select %113, %393, %391 : vector<1x128xi1>, vector<1x128xf32>
    %c110 = arith.constant 110 : index
    %395 = memref.load %arg2[%c110] : memref<192xf32, #tpu.memory_space<smem>>
    %396 = vector.broadcast %395 : f32 to vector<1x128xf32>
    %397 = arith.select %115, %396, %394 : vector<1x128xi1>, vector<1x128xf32>
    %c118 = arith.constant 118 : index
    %398 = memref.load %arg2[%c118] : memref<192xf32, #tpu.memory_space<smem>>
    %399 = vector.broadcast %398 : f32 to vector<1x128xf32>
    %400 = arith.select %117, %399, %397 : vector<1x128xi1>, vector<1x128xf32>
    %c126 = arith.constant 126 : index
    %401 = memref.load %arg2[%c126] : memref<192xf32, #tpu.memory_space<smem>>
    %402 = vector.broadcast %401 : f32 to vector<1x128xf32>
    %403 = arith.select %119, %402, %400 : vector<1x128xi1>, vector<1x128xf32>
    %c0_77 = arith.constant 0 : index
    %c14_78 = arith.constant 14 : index
    %c0_79 = arith.constant 0 : index
    %c0_80 = arith.constant 0 : index
    %404 = vector.load %arg4[%c0_77, %c14_78, %c0_79, %c0_80] : memref<1x26x1x128xf32, #tpu.memory_space<vmem>>, vector<1x1x1x128xf32>
    %405 = vector.shape_cast %404 : vector<1x1x1x128xf32> to vector<1x128xf32>
    %406 = vector.shape_cast %403 : vector<1x128xf32> to vector<1x1x1x128xf32>
    tpu.vector_store %arg4[%c0_77, %c14_78, %c0_79, %c0_80], %406 {strides = array<i32>} : memref<1x26x1x128xf32, #tpu.memory_space<vmem>>, vector<1x1x1x128xf32>,
    %c31 = arith.constant 31 : index
    %407 = memref.load %arg2[%c31] : memref<192xf32, #tpu.memory_space<smem>>
    %408 = vector.broadcast %407 : f32 to vector<1x128xf32>
    %c39 = arith.constant 39 : index
    %409 = memref.load %arg2[%c39] : memref<192xf32, #tpu.memory_space<smem>>
    %410 = vector.broadcast %409 : f32 to vector<1x128xf32>
    %411 = arith.select %97, %410, %408 : vector<1x128xi1>, vector<1x128xf32>
    %c47 = arith.constant 47 : index
    %412 = memref.load %arg2[%c47] : memref<192xf32, #tpu.memory_space<smem>>
    %413 = vector.broadcast %412 : f32 to vector<1x128xf32>
    %414 = arith.select %99, %413, %411 : vector<1x128xi1>, vector<1x128xf32>
    %c55 = arith.constant 55 : index
    %415 = memref.load %arg2[%c55] : memref<192xf32, #tpu.memory_space<smem>>
    %416 = vector.broadcast %415 : f32 to vector<1x128xf32>
    %417 = arith.select %101, %416, %414 : vector<1x128xi1>, vector<1x128xf32>
    %c63 = arith.constant 63 : index
    %418 = memref.load %arg2[%c63] : memref<192xf32, #tpu.memory_space<smem>>
    %419 = vector.broadcast %418 : f32 to vector<1x128xf32>
    %420 = arith.select %103, %419, %417 : vector<1x128xi1>, vector<1x128xf32>
    %c71 = arith.constant 71 : index
    %421 = memref.load %arg2[%c71] : memref<192xf32, #tpu.memory_space<smem>>
    %422 = vector.broadcast %421 : f32 to vector<1x128xf32>
    %423 = arith.select %105, %422, %420 : vector<1x128xi1>, vector<1x128xf32>
    %c79 = arith.constant 79 : index
    %424 = memref.load %arg2[%c79] : memref<192xf32, #tpu.memory_space<smem>>
    %425 = vector.broadcast %424 : f32 to vector<1x128xf32>
    %426 = arith.select %107, %425, %423 : vector<1x128xi1>, vector<1x128xf32>
    %c87 = arith.constant 87 : index
    %427 = memref.load %arg2[%c87] : memref<192xf32, #tpu.memory_space<smem>>
    %428 = vector.broadcast %427 : f32 to vector<1x128xf32>
    %429 = arith.select %109, %428, %426 : vector<1x128xi1>, vector<1x128xf32>
    %c95 = arith.constant 95 : index
    %430 = memref.load %arg2[%c95] : memref<192xf32, #tpu.memory_space<smem>>
    %431 = vector.broadcast %430 : f32 to vector<1x128xf32>
    %432 = arith.select %111, %431, %429 : vector<1x128xi1>, vector<1x128xf32>
    %c103 = arith.constant 103 : index
    %433 = memref.load %arg2[%c103] : memref<192xf32, #tpu.memory_space<smem>>
    %434 = vector.broadcast %433 : f32 to vector<1x128xf32>
    %435 = arith.select %113, %434, %432 : vector<1x128xi1>, vector<1x128xf32>
    %c111 = arith.constant 111 : index
    %436 = memref.load %arg2[%c111] : memref<192xf32, #tpu.memory_space<smem>>
    %437 = vector.broadcast %436 : f32 to vector<1x128xf32>
    %438 = arith.select %115, %437, %435 : vector<1x128xi1>, vector<1x128xf32>
    %c119 = arith.constant 119 : index
    %439 = memref.load %arg2[%c119] : memref<192xf32, #tpu.memory_space<smem>>
    %440 = vector.broadcast %439 : f32 to vector<1x128xf32>
    %441 = arith.select %117, %440, %438 : vector<1x128xi1>, vector<1x128xf32>
    %c127 = arith.constant 127 : index
    %442 = memref.load %arg2[%c127] : memref<192xf32, #tpu.memory_space<smem>>
    %443 = vector.broadcast %442 : f32 to vector<1x128xf32>
    %444 = arith.select %119, %443, %441 : vector<1x128xi1>, vector<1x128xf32>
    %c0_81 = arith.constant 0 : index
    %c15_82 = arith.constant 15 : index
    %c0_83 = arith.constant 0 : index
    %c0_84 = arith.constant 0 : index
    %445 = vector.load %arg4[%c0_81, %c15_82, %c0_83, %c0_84] : memref<1x26x1x128xf32, #tpu.memory_space<vmem>>, vector<1x1x1x128xf32>
    %446 = vector.shape_cast %445 : vector<1x1x1x128xf32> to vector<1x128xf32>
    %447 = vector.shape_cast %444 : vector<1x128xf32> to vector<1x1x1x128xf32>
    tpu.vector_store %arg4[%c0_81, %c15_82, %c0_83, %c0_84], %447 {strides = array<i32>} : memref<1x26x1x128xf32, #tpu.memory_space<vmem>>, vector<1x1x1x128xf32>,
    %c0_85 = arith.constant 0 : index
    %c2_86 = arith.constant 2 : index
    %c0_87 = arith.constant 0 : index
    %c0_88 = arith.constant 0 : index
    %448 = vector.load %arg3[%c0_85, %c2_86, %c0_87, %c0_88] : memref<1x5x1x128xf32, #tpu.memory_space<vmem>>, vector<1x1x1x128xf32>
    %449 = vector.shape_cast %448 : vector<1x1x1x128xf32> to vector<1x128xf32>
    %cst_89 = arith.constant 1.000000e+00 : f32
    %450 = vector.broadcast %cst_89 : f32 to vector<1x128xf32>
    %451 = arith.cmpf oeq, %449, %450 : vector<1x128xf32>
    %cst_90 = arith.constant 2.000000e+00 : f32
    %452 = vector.broadcast %cst_90 : f32 to vector<1x128xf32>
    %453 = arith.cmpf oeq, %449, %452 : vector<1x128xf32>
    %cst_91 = arith.constant 3.000000e+00 : f32
    %454 = vector.broadcast %cst_91 : f32 to vector<1x128xf32>
    %455 = arith.cmpf oeq, %449, %454 : vector<1x128xf32>
    %cst_92 = arith.constant 4.000000e+00 : f32
    %456 = vector.broadcast %cst_92 : f32 to vector<1x128xf32>
    %457 = arith.cmpf oeq, %449, %456 : vector<1x128xf32>
    %cst_93 = arith.constant 5.000000e+00 : f32
    %458 = vector.broadcast %cst_93 : f32 to vector<1x128xf32>
    %459 = arith.cmpf oeq, %449, %458 : vector<1x128xf32>
    %cst_94 = arith.constant 6.000000e+00 : f32
    %460 = vector.broadcast %cst_94 : f32 to vector<1x128xf32>
    %461 = arith.cmpf oeq, %449, %460 : vector<1x128xf32>
    %cst_95 = arith.constant 7.000000e+00 : f32
    %462 = vector.broadcast %cst_95 : f32 to vector<1x128xf32>
    %463 = arith.cmpf oeq, %449, %462 : vector<1x128xf32>
    %c128 = arith.constant 128 : index
    %464 = memref.load %arg2[%c128] : memref<192xf32, #tpu.memory_space<smem>>
    %465 = vector.broadcast %464 : f32 to vector<1x128xf32>
    %c136 = arith.constant 136 : index
    %466 = memref.load %arg2[%c136] : memref<192xf32, #tpu.memory_space<smem>>
    %467 = vector.broadcast %466 : f32 to vector<1x128xf32>
    %468 = arith.select %451, %467, %465 : vector<1x128xi1>, vector<1x128xf32>
    %c144 = arith.constant 144 : index
    %469 = memref.load %arg2[%c144] : memref<192xf32, #tpu.memory_space<smem>>
    %470 = vector.broadcast %469 : f32 to vector<1x128xf32>
    %471 = arith.select %453, %470, %468 : vector<1x128xi1>, vector<1x128xf32>
    %c152 = arith.constant 152 : index
    %472 = memref.load %arg2[%c152] : memref<192xf32, #tpu.memory_space<smem>>
    %473 = vector.broadcast %472 : f32 to vector<1x128xf32>
    %474 = arith.select %455, %473, %471 : vector<1x128xi1>, vector<1x128xf32>
    %c160 = arith.constant 160 : index
    %475 = memref.load %arg2[%c160] : memref<192xf32, #tpu.memory_space<smem>>
    %476 = vector.broadcast %475 : f32 to vector<1x128xf32>
    %477 = arith.select %457, %476, %474 : vector<1x128xi1>, vector<1x128xf32>
    %c168 = arith.constant 168 : index
    %478 = memref.load %arg2[%c168] : memref<192xf32, #tpu.memory_space<smem>>
    %479 = vector.broadcast %478 : f32 to vector<1x128xf32>
    %480 = arith.select %459, %479, %477 : vector<1x128xi1>, vector<1x128xf32>
    %c176 = arith.constant 176 : index
    %481 = memref.load %arg2[%c176] : memref<192xf32, #tpu.memory_space<smem>>
    %482 = vector.broadcast %481 : f32 to vector<1x128xf32>
    %483 = arith.select %461, %482, %480 : vector<1x128xi1>, vector<1x128xf32>
    %c184 = arith.constant 184 : index
    %484 = memref.load %arg2[%c184] : memref<192xf32, #tpu.memory_space<smem>>
    %485 = vector.broadcast %484 : f32 to vector<1x128xf32>
    %486 = arith.select %463, %485, %483 : vector<1x128xi1>, vector<1x128xf32>
    %c0_96 = arith.constant 0 : index
    %c16_97 = arith.constant 16 : index
    %c0_98 = arith.constant 0 : index
    %c0_99 = arith.constant 0 : index
    %487 = vector.load %arg4[%c0_96, %c16_97, %c0_98, %c0_99] : memref<1x26x1x128xf32, #tpu.memory_space<vmem>>, vector<1x1x1x128xf32>
    %488 = vector.shape_cast %487 : vector<1x1x1x128xf32> to vector<1x128xf32>
    %489 = vector.shape_cast %486 : vector<1x128xf32> to vector<1x1x1x128xf32>
    tpu.vector_store %arg4[%c0_96, %c16_97, %c0_98, %c0_99], %489 {strides = array<i32>} : memref<1x26x1x128xf32, #tpu.memory_space<vmem>>, vector<1x1x1x128xf32>,
    %c129 = arith.constant 129 : index
    %490 = memref.load %arg2[%c129] : memref<192xf32, #tpu.memory_space<smem>>
    %491 = vector.broadcast %490 : f32 to vector<1x128xf32>
    %c137 = arith.constant 137 : index
    %492 = memref.load %arg2[%c137] : memref<192xf32, #tpu.memory_space<smem>>
    %493 = vector.broadcast %492 : f32 to vector<1x128xf32>
    %494 = arith.select %451, %493, %491 : vector<1x128xi1>, vector<1x128xf32>
    %c145 = arith.constant 145 : index
    %495 = memref.load %arg2[%c145] : memref<192xf32, #tpu.memory_space<smem>>
    %496 = vector.broadcast %495 : f32 to vector<1x128xf32>
    %497 = arith.select %453, %496, %494 : vector<1x128xi1>, vector<1x128xf32>
    %c153 = arith.constant 153 : index
    %498 = memref.load %arg2[%c153] : memref<192xf32, #tpu.memory_space<smem>>
    %499 = vector.broadcast %498 : f32 to vector<1x128xf32>
    %500 = arith.select %455, %499, %497 : vector<1x128xi1>, vector<1x128xf32>
    %c161 = arith.constant 161 : index
    %501 = memref.load %arg2[%c161] : memref<192xf32, #tpu.memory_space<smem>>
    %502 = vector.broadcast %501 : f32 to vector<1x128xf32>
    %503 = arith.select %457, %502, %500 : vector<1x128xi1>, vector<1x128xf32>
    %c169 = arith.constant 169 : index
    %504 = memref.load %arg2[%c169] : memref<192xf32, #tpu.memory_space<smem>>
    %505 = vector.broadcast %504 : f32 to vector<1x128xf32>
    %506 = arith.select %459, %505, %503 : vector<1x128xi1>, vector<1x128xf32>
    %c177 = arith.constant 177 : index
    %507 = memref.load %arg2[%c177] : memref<192xf32, #tpu.memory_space<smem>>
    %508 = vector.broadcast %507 : f32 to vector<1x128xf32>
    %509 = arith.select %461, %508, %506 : vector<1x128xi1>, vector<1x128xf32>
    %c185 = arith.constant 185 : index
    %510 = memref.load %arg2[%c185] : memref<192xf32, #tpu.memory_space<smem>>
    %511 = vector.broadcast %510 : f32 to vector<1x128xf32>
    %512 = arith.select %463, %511, %509 : vector<1x128xi1>, vector<1x128xf32>
    %c0_100 = arith.constant 0 : index
    %c17_101 = arith.constant 17 : index
    %c0_102 = arith.constant 0 : index
    %c0_103 = arith.constant 0 : index
    %513 = vector.load %arg4[%c0_100, %c17_101, %c0_102, %c0_103] : memref<1x26x1x128xf32, #tpu.memory_space<vmem>>, vector<1x1x1x128xf32>
    %514 = vector.shape_cast %513 : vector<1x1x1x128xf32> to vector<1x128xf32>
    %515 = vector.shape_cast %512 : vector<1x128xf32> to vector<1x1x1x128xf32>
    tpu.vector_store %arg4[%c0_100, %c17_101, %c0_102, %c0_103], %515 {strides = array<i32>} : memref<1x26x1x128xf32, #tpu.memory_space<vmem>>, vector<1x1x1x128xf32>,
    %c130 = arith.constant 130 : index
    %516 = memref.load %arg2[%c130] : memref<192xf32, #tpu.memory_space<smem>>
    %517 = vector.broadcast %516 : f32 to vector<1x128xf32>
    %c138 = arith.constant 138 : index
    %518 = memref.load %arg2[%c138] : memref<192xf32, #tpu.memory_space<smem>>
    %519 = vector.broadcast %518 : f32 to vector<1x128xf32>
    %520 = arith.select %451, %519, %517 : vector<1x128xi1>, vector<1x128xf32>
    %c146 = arith.constant 146 : index
    %521 = memref.load %arg2[%c146] : memref<192xf32, #tpu.memory_space<smem>>
    %522 = vector.broadcast %521 : f32 to vector<1x128xf32>
    %523 = arith.select %453, %522, %520 : vector<1x128xi1>, vector<1x128xf32>
    %c154 = arith.constant 154 : index
    %524 = memref.load %arg2[%c154] : memref<192xf32, #tpu.memory_space<smem>>
    %525 = vector.broadcast %524 : f32 to vector<1x128xf32>
    %526 = arith.select %455, %525, %523 : vector<1x128xi1>, vector<1x128xf32>
    %c162 = arith.constant 162 : index
    %527 = memref.load %arg2[%c162] : memref<192xf32, #tpu.memory_space<smem>>
    %528 = vector.broadcast %527 : f32 to vector<1x128xf32>
    %529 = arith.select %457, %528, %526 : vector<1x128xi1>, vector<1x128xf32>
    %c170 = arith.constant 170 : index
    %530 = memref.load %arg2[%c170] : memref<192xf32, #tpu.memory_space<smem>>
    %531 = vector.broadcast %530 : f32 to vector<1x128xf32>
    %532 = arith.select %459, %531, %529 : vector<1x128xi1>, vector<1x128xf32>
    %c178 = arith.constant 178 : index
    %533 = memref.load %arg2[%c178] : memref<192xf32, #tpu.memory_space<smem>>
    %534 = vector.broadcast %533 : f32 to vector<1x128xf32>
    %535 = arith.select %461, %534, %532 : vector<1x128xi1>, vector<1x128xf32>
    %c186 = arith.constant 186 : index
    %536 = memref.load %arg2[%c186] : memref<192xf32, #tpu.memory_space<smem>>
    %537 = vector.broadcast %536 : f32 to vector<1x128xf32>
    %538 = arith.select %463, %537, %535 : vector<1x128xi1>, vector<1x128xf32>
    %c0_104 = arith.constant 0 : index
    %c18_105 = arith.constant 18 : index
    %c0_106 = arith.constant 0 : index
    %c0_107 = arith.constant 0 : index
    %539 = vector.load %arg4[%c0_104, %c18_105, %c0_106, %c0_107] : memref<1x26x1x128xf32, #tpu.memory_space<vmem>>, vector<1x1x1x128xf32>
    %540 = vector.shape_cast %539 : vector<1x1x1x128xf32> to vector<1x128xf32>
    %541 = vector.shape_cast %538 : vector<1x128xf32> to vector<1x1x1x128xf32>
    tpu.vector_store %arg4[%c0_104, %c18_105, %c0_106, %c0_107], %541 {strides = array<i32>} : memref<1x26x1x128xf32, #tpu.memory_space<vmem>>, vector<1x1x1x128xf32>,
    %c131 = arith.constant 131 : index
    %542 = memref.load %arg2[%c131] : memref<192xf32, #tpu.memory_space<smem>>
    %543 = vector.broadcast %542 : f32 to vector<1x128xf32>
    %c139 = arith.constant 139 : index
    %544 = memref.load %arg2[%c139] : memref<192xf32, #tpu.memory_space<smem>>
    %545 = vector.broadcast %544 : f32 to vector<1x128xf32>
    %546 = arith.select %451, %545, %543 : vector<1x128xi1>, vector<1x128xf32>
    %c147 = arith.constant 147 : index
    %547 = memref.load %arg2[%c147] : memref<192xf32, #tpu.memory_space<smem>>
    %548 = vector.broadcast %547 : f32 to vector<1x128xf32>
    %549 = arith.select %453, %548, %546 : vector<1x128xi1>, vector<1x128xf32>
    %c155 = arith.constant 155 : index
    %550 = memref.load %arg2[%c155] : memref<192xf32, #tpu.memory_space<smem>>
    %551 = vector.broadcast %550 : f32 to vector<1x128xf32>
    %552 = arith.select %455, %551, %549 : vector<1x128xi1>, vector<1x128xf32>
    %c163 = arith.constant 163 : index
    %553 = memref.load %arg2[%c163] : memref<192xf32, #tpu.memory_space<smem>>
    %554 = vector.broadcast %553 : f32 to vector<1x128xf32>
    %555 = arith.select %457, %554, %552 : vector<1x128xi1>, vector<1x128xf32>
    %c171 = arith.constant 171 : index
    %556 = memref.load %arg2[%c171] : memref<192xf32, #tpu.memory_space<smem>>
    %557 = vector.broadcast %556 : f32 to vector<1x128xf32>
    %558 = arith.select %459, %557, %555 : vector<1x128xi1>, vector<1x128xf32>
    %c179 = arith.constant 179 : index
    %559 = memref.load %arg2[%c179] : memref<192xf32, #tpu.memory_space<smem>>
    %560 = vector.broadcast %559 : f32 to vector<1x128xf32>
    %561 = arith.select %461, %560, %558 : vector<1x128xi1>, vector<1x128xf32>
    %c187 = arith.constant 187 : index
    %562 = memref.load %arg2[%c187] : memref<192xf32, #tpu.memory_space<smem>>
    %563 = vector.broadcast %562 : f32 to vector<1x128xf32>
    %564 = arith.select %463, %563, %561 : vector<1x128xi1>, vector<1x128xf32>
    %c0_108 = arith.constant 0 : index
    %c19_109 = arith.constant 19 : index
    %c0_110 = arith.constant 0 : index
    %c0_111 = arith.constant 0 : index
    %565 = vector.load %arg4[%c0_108, %c19_109, %c0_110, %c0_111] : memref<1x26x1x128xf32, #tpu.memory_space<vmem>>, vector<1x1x1x128xf32>
    %566 = vector.shape_cast %565 : vector<1x1x1x128xf32> to vector<1x128xf32>
    %567 = vector.shape_cast %564 : vector<1x128xf32> to vector<1x1x1x128xf32>
    tpu.vector_store %arg4[%c0_108, %c19_109, %c0_110, %c0_111], %567 {strides = array<i32>} : memref<1x26x1x128xf32, #tpu.memory_space<vmem>>, vector<1x1x1x128xf32>,
    %c132 = arith.constant 132 : index
    %568 = memref.load %arg2[%c132] : memref<192xf32, #tpu.memory_space<smem>>
    %569 = vector.broadcast %568 : f32 to vector<1x128xf32>
    %c140 = arith.constant 140 : index
    %570 = memref.load %arg2[%c140] : memref<192xf32, #tpu.memory_space<smem>>
    %571 = vector.broadcast %570 : f32 to vector<1x128xf32>
    %572 = arith.select %451, %571, %569 : vector<1x128xi1>, vector<1x128xf32>
    %c148 = arith.constant 148 : index
    %573 = memref.load %arg2[%c148] : memref<192xf32, #tpu.memory_space<smem>>
    %574 = vector.broadcast %573 : f32 to vector<1x128xf32>
    %575 = arith.select %453, %574, %572 : vector<1x128xi1>, vector<1x128xf32>
    %c156 = arith.constant 156 : index
    %576 = memref.load %arg2[%c156] : memref<192xf32, #tpu.memory_space<smem>>
    %577 = vector.broadcast %576 : f32 to vector<1x128xf32>
    %578 = arith.select %455, %577, %575 : vector<1x128xi1>, vector<1x128xf32>
    %c164 = arith.constant 164 : index
    %579 = memref.load %arg2[%c164] : memref<192xf32, #tpu.memory_space<smem>>
    %580 = vector.broadcast %579 : f32 to vector<1x128xf32>
    %581 = arith.select %457, %580, %578 : vector<1x128xi1>, vector<1x128xf32>
    %c172 = arith.constant 172 : index
    %582 = memref.load %arg2[%c172] : memref<192xf32, #tpu.memory_space<smem>>
    %583 = vector.broadcast %582 : f32 to vector<1x128xf32>
    %584 = arith.select %459, %583, %581 : vector<1x128xi1>, vector<1x128xf32>
    %c180 = arith.constant 180 : index
    %585 = memref.load %arg2[%c180] : memref<192xf32, #tpu.memory_space<smem>>
    %586 = vector.broadcast %585 : f32 to vector<1x128xf32>
    %587 = arith.select %461, %586, %584 : vector<1x128xi1>, vector<1x128xf32>
    %c188 = arith.constant 188 : index
    %588 = memref.load %arg2[%c188] : memref<192xf32, #tpu.memory_space<smem>>
    %589 = vector.broadcast %588 : f32 to vector<1x128xf32>
    %590 = arith.select %463, %589, %587 : vector<1x128xi1>, vector<1x128xf32>
    %c0_112 = arith.constant 0 : index
    %c20_113 = arith.constant 20 : index
    %c0_114 = arith.constant 0 : index
    %c0_115 = arith.constant 0 : index
    %591 = vector.load %arg4[%c0_112, %c20_113, %c0_114, %c0_115] : memref<1x26x1x128xf32, #tpu.memory_space<vmem>>, vector<1x1x1x128xf32>
    %592 = vector.shape_cast %591 : vector<1x1x1x128xf32> to vector<1x128xf32>
    %593 = vector.shape_cast %590 : vector<1x128xf32> to vector<1x1x1x128xf32>
    tpu.vector_store %arg4[%c0_112, %c20_113, %c0_114, %c0_115], %593 {strides = array<i32>} : memref<1x26x1x128xf32, #tpu.memory_space<vmem>>, vector<1x1x1x128xf32>,
    %c133 = arith.constant 133 : index
    %594 = memref.load %arg2[%c133] : memref<192xf32, #tpu.memory_space<smem>>
    %595 = vector.broadcast %594 : f32 to vector<1x128xf32>
    %c141 = arith.constant 141 : index
    %596 = memref.load %arg2[%c141] : memref<192xf32, #tpu.memory_space<smem>>
    %597 = vector.broadcast %596 : f32 to vector<1x128xf32>
    %598 = arith.select %451, %597, %595 : vector<1x128xi1>, vector<1x128xf32>
    %c149 = arith.constant 149 : index
    %599 = memref.load %arg2[%c149] : memref<192xf32, #tpu.memory_space<smem>>
    %600 = vector.broadcast %599 : f32 to vector<1x128xf32>
    %601 = arith.select %453, %600, %598 : vector<1x128xi1>, vector<1x128xf32>
    %c157 = arith.constant 157 : index
    %602 = memref.load %arg2[%c157] : memref<192xf32, #tpu.memory_space<smem>>
    %603 = vector.broadcast %602 : f32 to vector<1x128xf32>
    %604 = arith.select %455, %603, %601 : vector<1x128xi1>, vector<1x128xf32>
    %c165 = arith.constant 165 : index
    %605 = memref.load %arg2[%c165] : memref<192xf32, #tpu.memory_space<smem>>
    %606 = vector.broadcast %605 : f32 to vector<1x128xf32>
    %607 = arith.select %457, %606, %604 : vector<1x128xi1>, vector<1x128xf32>
    %c173 = arith.constant 173 : index
    %608 = memref.load %arg2[%c173] : memref<192xf32, #tpu.memory_space<smem>>
    %609 = vector.broadcast %608 : f32 to vector<1x128xf32>
    %610 = arith.select %459, %609, %607 : vector<1x128xi1>, vector<1x128xf32>
    %c181 = arith.constant 181 : index
    %611 = memref.load %arg2[%c181] : memref<192xf32, #tpu.memory_space<smem>>
    %612 = vector.broadcast %611 : f32 to vector<1x128xf32>
    %613 = arith.select %461, %612, %610 : vector<1x128xi1>, vector<1x128xf32>
    %c189 = arith.constant 189 : index
    %614 = memref.load %arg2[%c189] : memref<192xf32, #tpu.memory_space<smem>>
    %615 = vector.broadcast %614 : f32 to vector<1x128xf32>
    %616 = arith.select %463, %615, %613 : vector<1x128xi1>, vector<1x128xf32>
    %c0_116 = arith.constant 0 : index
    %c21_117 = arith.constant 21 : index
    %c0_118 = arith.constant 0 : index
    %c0_119 = arith.constant 0 : index
    %617 = vector.load %arg4[%c0_116, %c21_117, %c0_118, %c0_119] : memref<1x26x1x128xf32, #tpu.memory_space<vmem>>, vector<1x1x1x128xf32>
    %618 = vector.shape_cast %617 : vector<1x1x1x128xf32> to vector<1x128xf32>
    %619 = vector.shape_cast %616 : vector<1x128xf32> to vector<1x1x1x128xf32>
    tpu.vector_store %arg4[%c0_116, %c21_117, %c0_118, %c0_119], %619 {strides = array<i32>} : memref<1x26x1x128xf32, #tpu.memory_space<vmem>>, vector<1x1x1x128xf32>,
    %c134 = arith.constant 134 : index
    %620 = memref.load %arg2[%c134] : memref<192xf32, #tpu.memory_space<smem>>
    %621 = vector.broadcast %620 : f32 to vector<1x128xf32>
    %c142 = arith.constant 142 : index
    %622 = memref.load %arg2[%c142] : memref<192xf32, #tpu.memory_space<smem>>
    %623 = vector.broadcast %622 : f32 to vector<1x128xf32>
    %624 = arith.select %451, %623, %621 : vector<1x128xi1>, vector<1x128xf32>
    %c150 = arith.constant 150 : index
    %625 = memref.load %arg2[%c150] : memref<192xf32, #tpu.memory_space<smem>>
    %626 = vector.broadcast %625 : f32 to vector<1x128xf32>
    %627 = arith.select %453, %626, %624 : vector<1x128xi1>, vector<1x128xf32>
    %c158 = arith.constant 158 : index
    %628 = memref.load %arg2[%c158] : memref<192xf32, #tpu.memory_space<smem>>
    %629 = vector.broadcast %628 : f32 to vector<1x128xf32>
    %630 = arith.select %455, %629, %627 : vector<1x128xi1>, vector<1x128xf32>
    %c166 = arith.constant 166 : index
    %631 = memref.load %arg2[%c166] : memref<192xf32, #tpu.memory_space<smem>>
    %632 = vector.broadcast %631 : f32 to vector<1x128xf32>
    %633 = arith.select %457, %632, %630 : vector<1x128xi1>, vector<1x128xf32>
    %c174 = arith.constant 174 : index
    %634 = memref.load %arg2[%c174] : memref<192xf32, #tpu.memory_space<smem>>
    %635 = vector.broadcast %634 : f32 to vector<1x128xf32>
    %636 = arith.select %459, %635, %633 : vector<1x128xi1>, vector<1x128xf32>
    %c182 = arith.constant 182 : index
    %637 = memref.load %arg2[%c182] : memref<192xf32, #tpu.memory_space<smem>>
    %638 = vector.broadcast %637 : f32 to vector<1x128xf32>
    %639 = arith.select %461, %638, %636 : vector<1x128xi1>, vector<1x128xf32>
    %c190 = arith.constant 190 : index
    %640 = memref.load %arg2[%c190] : memref<192xf32, #tpu.memory_space<smem>>
    %641 = vector.broadcast %640 : f32 to vector<1x128xf32>
    %642 = arith.select %463, %641, %639 : vector<1x128xi1>, vector<1x128xf32>
    %c0_120 = arith.constant 0 : index
    %c22_121 = arith.constant 22 : index
    %c0_122 = arith.constant 0 : index
    %c0_123 = arith.constant 0 : index
    %643 = vector.load %arg4[%c0_120, %c22_121, %c0_122, %c0_123] : memref<1x26x1x128xf32, #tpu.memory_space<vmem>>, vector<1x1x1x128xf32>
    %644 = vector.shape_cast %643 : vector<1x1x1x128xf32> to vector<1x128xf32>
    %645 = vector.shape_cast %642 : vector<1x128xf32> to vector<1x1x1x128xf32>
    tpu.vector_store %arg4[%c0_120, %c22_121, %c0_122, %c0_123], %645 {strides = array<i32>} : memref<1x26x1x128xf32, #tpu.memory_space<vmem>>, vector<1x1x1x128xf32>,
    %c135 = arith.constant 135 : index
    %646 = memref.load %arg2[%c135] : memref<192xf32, #tpu.memory_space<smem>>
    %647 = vector.broadcast %646 : f32 to vector<1x128xf32>
    %c143 = arith.constant 143 : index
    %648 = memref.load %arg2[%c143] : memref<192xf32, #tpu.memory_space<smem>>
    %649 = vector.broadcast %648 : f32 to vector<1x128xf32>
    %650 = arith.select %451, %649, %647 : vector<1x128xi1>, vector<1x128xf32>
    %c151 = arith.constant 151 : index
    %651 = memref.load %arg2[%c151] : memref<192xf32, #tpu.memory_space<smem>>
    %652 = vector.broadcast %651 : f32 to vector<1x128xf32>
    %653 = arith.select %453, %652, %650 : vector<1x128xi1>, vector<1x128xf32>
    %c159 = arith.constant 159 : index
    %654 = memref.load %arg2[%c159] : memref<192xf32, #tpu.memory_space<smem>>
    %655 = vector.broadcast %654 : f32 to vector<1x128xf32>
    %656 = arith.select %455, %655, %653 : vector<1x128xi1>, vector<1x128xf32>
    %c167 = arith.constant 167 : index
    %657 = memref.load %arg2[%c167] : memref<192xf32, #tpu.memory_space<smem>>
    %658 = vector.broadcast %657 : f32 to vector<1x128xf32>
    %659 = arith.select %457, %658, %656 : vector<1x128xi1>, vector<1x128xf32>
    %c175 = arith.constant 175 : index
    %660 = memref.load %arg2[%c175] : memref<192xf32, #tpu.memory_space<smem>>
    %661 = vector.broadcast %660 : f32 to vector<1x128xf32>
    %662 = arith.select %459, %661, %659 : vector<1x128xi1>, vector<1x128xf32>
    %c183 = arith.constant 183 : index
    %663 = memref.load %arg2[%c183] : memref<192xf32, #tpu.memory_space<smem>>
    %664 = vector.broadcast %663 : f32 to vector<1x128xf32>
    %665 = arith.select %461, %664, %662 : vector<1x128xi1>, vector<1x128xf32>
    %c191 = arith.constant 191 : index
    %666 = memref.load %arg2[%c191] : memref<192xf32, #tpu.memory_space<smem>>
    %667 = vector.broadcast %666 : f32 to vector<1x128xf32>
    %668 = arith.select %463, %667, %665 : vector<1x128xi1>, vector<1x128xf32>
    %c0_124 = arith.constant 0 : index
    %c23_125 = arith.constant 23 : index
    %c0_126 = arith.constant 0 : index
    %c0_127 = arith.constant 0 : index
    %669 = vector.load %arg4[%c0_124, %c23_125, %c0_126, %c0_127] : memref<1x26x1x128xf32, #tpu.memory_space<vmem>>, vector<1x1x1x128xf32>
    %670 = vector.shape_cast %669 : vector<1x1x1x128xf32> to vector<1x128xf32>
    %671 = vector.shape_cast %668 : vector<1x128xf32> to vector<1x1x1x128xf32>
    tpu.vector_store %arg4[%c0_124, %c23_125, %c0_126, %c0_127], %671 {strides = array<i32>} : memref<1x26x1x128xf32, #tpu.memory_space<vmem>>, vector<1x1x1x128xf32>,
    %c0_128 = arith.constant 0 : index
    %c3_129 = arith.constant 3 : index
    %c0_130 = arith.constant 0 : index
    %c0_131 = arith.constant 0 : index
    %672 = vector.load %arg3[%c0_128, %c3_129, %c0_130, %c0_131] : memref<1x5x1x128xf32, #tpu.memory_space<vmem>>, vector<1x1x1x128xf32>
    %673 = vector.shape_cast %672 : vector<1x1x1x128xf32> to vector<1x128xf32>
    %c0_132 = arith.constant 0 : index
    %c24_133 = arith.constant 24 : index
    %c0_134 = arith.constant 0 : index
    %c0_135 = arith.constant 0 : index
    %674 = vector.load %arg4[%c0_132, %c24_133, %c0_134, %c0_135] : memref<1x26x1x128xf32, #tpu.memory_space<vmem>>, vector<1x1x1x128xf32>
    %675 = vector.shape_cast %674 : vector<1x1x1x128xf32> to vector<1x128xf32>
    %676 = vector.shape_cast %673 : vector<1x128xf32> to vector<1x1x1x128xf32>
    tpu.vector_store %arg4[%c0_132, %c24_133, %c0_134, %c0_135], %676 {strides = array<i32>} : memref<1x26x1x128xf32, #tpu.memory_space<vmem>>, vector<1x1x1x128xf32>,
    %c0_136 = arith.constant 0 : index
    %c4_137 = arith.constant 4 : index
    %c0_138 = arith.constant 0 : index
    %c0_139 = arith.constant 0 : index
    %677 = vector.load %arg3[%c0_136, %c4_137, %c0_138, %c0_139] : memref<1x5x1x128xf32, #tpu.memory_space<vmem>>, vector<1x1x1x128xf32>
    %678 = vector.shape_cast %677 : vector<1x1x1x128xf32> to vector<1x128xf32>
    %c0_140 = arith.constant 0 : index
    %c25_141 = arith.constant 25 : index
    %c0_142 = arith.constant 0 : index
    %c0_143 = arith.constant 0 : index
    %679 = vector.load %arg4[%c0_140, %c25_141, %c0_142, %c0_143] : memref<1x26x1x128xf32, #tpu.memory_space<vmem>>, vector<1x1x1x128xf32>
    %680 = vector.shape_cast %679 : vector<1x1x1x128xf32> to vector<1x128xf32>
    %681 = vector.shape_cast %678 : vector<1x128xf32> to vector<1x1x1x128xf32>
    tpu.vector_store %arg4[%c0_140, %c25_141, %c0_142, %c0_143], %681 {strides = array<i32>} : memref<1x26x1x128xf32, #tpu.memory_space<vmem>>, vector<1x1x1x128xf32>,
    return
  }
  func.func @transform_0(%arg0: i32, %arg1: i32) -> i32 {
    %c0_i32 = arith.constant 0 : i32
    %c0_i32_0 = arith.constant 0 : i32
    return %c0_i32 : i32
  }
  func.func @transform_1(%arg0: i32, %arg1: i32) -> (i32, i32, i32, i32) {
    %c0_i32 = arith.constant 0 : i32
    %c0_i32_0 = arith.constant 0 : i32
    %c0_i32_1 = arith.constant 0 : i32
    return %arg0, %c0_i32, %arg1, %c0_i32_0 : i32, i32, i32, i32
  }
  func.func @transform_2(%arg0: i32, %arg1: i32) -> (i32, i32, i32, i32) {
    %c0_i32 = arith.constant 0 : i32
    %c0_i32_0 = arith.constant 0 : i32
    %c0_i32_1 = arith.constant 0 : i32
    return %arg0, %c0_i32, %arg1, %c0_i32_0 : i32, i32, i32, i32
  }
}

</mosaic_0001>

<llo_original>
// kernel: tpu_custom_call.1
$region0: #{tpu_custom_call.1}
  #allocation0 [shape = 'u32[]', space=smem, size = 0x4, offset = 0x4, fixed_abs, tag = 'smem constant byte address 0x4 - core index']
  #allocation1 [shape = 'u32[144,128]{1,0:T(1,128)}', space=vmem, size = 0x12000, scoped, tag = 'internal scratch']
  %s0 = inlined_call_operand.hbm [shape: f32[192], index: 0, kind: input, shape index: {}]
  %s1 = inlined_call_operand.hbm [shape: f32[2,5,1,128], index: 1, kind: input, shape index: {}]
  %s2 = inlined_call_operand.hbm [shape: f32[2,26,1,128], index: 2, kind: output, shape index: {}]
  %s3 = sld [smem:[#allocation0]]
  $region49: #{tpu_custom_call.1} parent=0
    _
  %s5 = ssub.s32 1, %s3
  %s6 = scalar_select 0, %s5, %s3
  $region1: #{tpu_custom_call.1} parent=0
    #allocation2 [shape = 'u8[1024]{0}', space=smem, size = 0x400, scoped, tag = 'input window, operand 0, single buffered']
    #allocation3 [shape = 's32[2]{0}', space=sflag, size = 0x8, scoped, tag = 'scoped memory for tpu_custom_call.1']
    #allocation4 [shape = 's32[2]{0}', space=sflag, size = 0x8, scoped, tag = 'scoped memory for tpu_custom_call.1']
    #allocation5 [shape = 's32[2]{0}', space=sflag, size = 0x8, scoped, tag = 'scoped memory for tpu_custom_call.1']
    #allocation6 [shape = 'u8[5120]{0}', space=vmem, size = 0x1400, scoped, tag = 'input window, operand 1']
    #allocation7 [shape = 'u8[26624]{0}', space=vmem, size = 0x6800, scoped, tag = 'output window, operand 0']
    %7 = vsyncpa [#allocation5], 0
    %8 = vsyncpa [#allocation3], 0
    %s9 = scalar_lea.sflag [#allocation3], 1
    %10 = vsyncpa %s9, 0
    %11 = vsyncpa [#allocation4], 0
    %s12 = scalar_lea.sflag [#allocation4], 1
    %13 = vsyncpa %s12, 0
    loop: start=0, step=1, limit=4
    $region2: #{tpu_custom_call.1} parent=1 // loop_pre_header
      _
    $region3: #{tpu_custom_call.1} parent=1 // loop_header
      %s15 = sphi 0, %s19
      %p16 = scmp.ge.s32.totalorder %s15, 4
      %s22 = sphi 0, %s34
      %s23 = sphi 0, %s30
      %s24 = sphi 0, %s22
      %s25 = sphi 0, %s23
      %s26 = sphi 0, %s24
      %s27 = sphi 0, %s25
      %s35 = sphi 0, %s35
      %s37 = sphi 0, %s35
      %s38 = sphi 0, %s37
      %s52 = sphi 0, %s38
      %s60 = sphi 0, %s62
      %s63 = sphi 0, %s60
      %s64 = sphi 0, %s63
      %s80 = sphi 0, %s64
      %s88 = sphi 0, %s90
      %s91 = sphi 0, %s88
      %s92 = sphi 0, %s91
      %s108 = sphi 0, %s92
    $region4: #{tpu_custom_call.1} parent=1 // loop_header_branch
      %18 = sbr.rel (%p16) target = $region8
    $region5: #{tpu_custom_call.1} parent=1 // loop_body
      %s20 = ssub.s32 %s15, 1
      %s21 = ssub.s32 %s15, 2
      %s28 = sadd.s32 1, %s23
      %p29 = scmp.ge.s32.totalorder %s28, 1
      %s30 = scalar_select %p29, 0, %s28
      %s31 = sadd.s32 1, %s22
      %s32 = scalar_select %p29, %s31, %s22
      %p33 = scmp.ge.s32.totalorder %s32, 2
      %s34 = scalar_select %p33, 0, %s32
      %s36 = sadd.s32 %s35, 1
      %p39 = scmp.eq.s32.totalorder %s15, 1
      %p40 = scmp.ne.s32.totalorder %s35, %s37
      %p41 = scmp.eq.s32.totalorder %s15, 0
      %p42 = por %p40, %p41
      %p43 = scmp.ne.s32.totalorder %s35, %s37
      %p44 = scmp.eq.s32.totalorder %s20, 1
      %p45 = por %p43, %p44
      %p46 = scmp.ne.s32.totalorder %s37, %s38
      %p47 = scmp.eq.s32.totalorder %s20, 0
      %p48 = por %p46, %p47
      %p49 = scmp.ne.s32.totalorder %s37, %s38
      %p50 = scmp.eq.s32.totalorder %s21, 1
      %p51 = por %p49, %p50
      %p53 = scmp.ne.s32.totalorder %s38, %s52
      %p54 = scmp.eq.s32.totalorder %s21, 0
      %p55 = por %p53, %p54
      %s56 = ssub.s32 %s22, %s34
      %s57 = ssub.s32 %s23, %s30
      %s58 = sor.u32 %s56, %s57
      %p59 = scmp.eq.s32.totalorder %s58, 0
      %s61 = sadd.s32 %s60, 1
      %s62 = scalar_select %p59, %s60, %s61
      %p65 = pneg %p59
      %p66 = scmp.eq.s32.totalorder %s15, 1
      %p67 = por %p65, %p66
      %p68 = scmp.ne.s32.totalorder %s60, %s63
      %p69 = scmp.eq.s32.totalorder %s15, 0
      %p70 = por %p68, %p69
      %p71 = scmp.ne.s32.totalorder %s60, %s63
      %p72 = scmp.eq.s32.totalorder %s20, 1
      %p73 = por %p71, %p72
      %p74 = scmp.ne.s32.totalorder %s63, %s64
      %p75 = scmp.eq.s32.totalorder %s20, 0
      %p76 = por %p74, %p75
      %p77 = scmp.ne.s32.totalorder %s63, %s64
      %p78 = scmp.eq.s32.totalorder %s21, 1
      %p79 = por %p77, %p78
      %p81 = scmp.ne.s32.totalorder %s64, %s80
      %p82 = scmp.eq.s32.totalorder %s21, 0
      %p83 = por %p81, %p82
      %s84 = ssub.s32 %s22, %s34
      %s85 = ssub.s32 %s23, %s30
      %s86 = sor.u32 %s84, %s85
      %p87 = scmp.eq.s32.totalorder %s86, 0
      %s89 = sadd.s32 %s88, 1
      %s90 = scalar_select %p87, %s88, %s89
      %p93 = pneg %p87
      %p94 = scmp.eq.s32.totalorder %s15, 1
      %p95 = por %p93, %p94
      %p96 = scmp.ne.s32.totalorder %s88, %s91
      %p97 = scmp.eq.s32.totalorder %s15, 0
      %p98 = por %p96, %p97
      %p99 = scmp.ne.s32.totalorder %s88, %s91
      %p100 = scmp.eq.s32.totalorder %s20, 1
      %p101 = por %p99, %p100
      %p102 = scmp.ne.s32.totalorder %s91, %s92
      %p103 = scmp.eq.s32.totalorder %s20, 0
      %p104 = por %p102, %p103
      %p105 = scmp.ne.s32.totalorder %s91, %s92
      %p106 = scmp.eq.s32.totalorder %s21, 1
      %p107 = por %p105, %p106
      %p109 = scmp.ne.s32.totalorder %s92, %s108
      %p110 = scmp.eq.s32.totalorder %s21, 0
      %p111 = por %p109, %p110
      %p112 = scmp.le.s32.totalorder 1, %s15
      %p113 = scmp.lt.s32.totalorder %s15, 3
      %p114 = pnand %p112, %p113
      %p115 = pneg %p114
      // Predicated region
      $region9: #{tpu_custom_call.1} parent=5 // pred_check
        _
      $region10: #{tpu_custom_call.1} parent=5 // pred_check_branch
        %117 = sbr.rel (%p114) target = $region12
      $region11: #{tpu_custom_call.1} parent=5 // pred_region
        %s118 = ssub.s32 %s15, 1
        // Predicated region
        $region13: #{tpu_custom_call.1} parent=11 // pred_check
          %p119 = pneg %p48
        $region14: #{tpu_custom_call.1} parent=11 // pred_check_branch
          %121 = sbr.rel (%p119) target = $region16
        $region15: #{tpu_custom_call.1} parent=11 // pred_region
          %s123 = ssub.s32 32, 32
          %124 = vsyncadd [#allocation5], %s123
          %127 = dma.hbm_to_smem %s0, 32, [#allocation2], [#allocation5]
        $region16: #{tpu_custom_call.1} parent=11 // pred_fallthru
          _
      $region12: #{tpu_custom_call.1} parent=5 // pred_fallthru
        _
      %p128 = scmp.lt.s32.totalorder %s15, 2
      // Predicated region
      $region17: #{tpu_custom_call.1} parent=5 // pred_check
        %p129 = pneg %p128
      $region18: #{tpu_custom_call.1} parent=5 // pred_check_branch
        %131 = sbr.rel (%p129) target = $region20
      $region19: #{tpu_custom_call.1} parent=5 // pred_region
        // Predicated region
        $region21: #{tpu_custom_call.1} parent=19 // pred_check
          %p132 = pneg %p70
        $region22: #{tpu_custom_call.1} parent=19 // pred_check_branch
          %134 = sbr.rel (%p132) target = $region24
        $region23: #{tpu_custom_call.1} parent=19 // pred_region
          %s135 = sand.u32 %s60, 1
          %s136 = scalar_lea.sflag [#allocation3], %s135
          %s137 = sand.u32 %s60, 1
          %s138 = smul.addr %s137, 5
          %s139 = scalar_lea.vmem [#allocation6], %s138
          %s141 = ssub.s32 80, 80
          %142 = vsyncadd %s136, %s141
          %s143 = smul.addr %s22, 5
          %s144 = sadd.s32 %s23, %s143
          %s145 = smul.addr %s144, 16
          %s146 = scalar_lea.hbm %s1, %s145
          %s147 = sshll.u32 %s139, 4
          %s148 = int_to_ptr.vmem [resolvable:$true] %s147
          %153 = dma.hbm_to_vmem [thread:$0]  %s146, 80, %s148, %s136, 16, 16, 1
        $region24: #{tpu_custom_call.1} parent=19 // pred_fallthru
          _
      $region20: #{tpu_custom_call.1} parent=5 // pred_fallthru
        _
      %p154 = scmp.le.s32.totalorder 1, %s15
      %p155 = scmp.lt.s32.totalorder %s15, 3
      %p156 = pnand %p154, %p155
      %p157 = pneg %p156
      // Predicated region
      $region25: #{tpu_custom_call.1} parent=5 // pred_check
        _
      $region26: #{tpu_custom_call.1} parent=5 // pred_check_branch
        %159 = sbr.rel (%p156) target = $region28
      $region27: #{tpu_custom_call.1} parent=5 // pred_region
        %s160 = ssub.s32 %s15, 1
        // Predicated region
        $region29: #{tpu_custom_call.1} parent=27 // pred_check
          %p161 = pneg %p48
        $region30: #{tpu_custom_call.1} parent=27 // pred_check_branch
          %163 = sbr.rel (%p161) target = $region32
        $region31: #{tpu_custom_call.1} parent=27 // pred_region
          %164 = dma.done [#allocation5], 32
        $region32: #{tpu_custom_call.1} parent=27 // pred_fallthru
          _
        %s165 = sand.u32 %s63, 1
        %s166 = scalar_lea.sflag [#allocation3], %s165
        %s167 = sand.u32 %s63, 1
        %s168 = smul.addr %s167, 5
        %s169 = scalar_lea.vmem [#allocation6], %s168
        // Predicated region
        $region33: #{tpu_custom_call.1} parent=27 // pred_check
          %p170 = pneg %p76
        $region34: #{tpu_custom_call.1} parent=27 // pred_check_branch
          %172 = sbr.rel (%p170) target = $region36
        $region35: #{tpu_custom_call.1} parent=27 // pred_region
          %173 = dma.done %s166, 80
        $region36: #{tpu_custom_call.1} parent=27 // pred_fallthru
          _
        %174 = sfence
        %p175 = pneg %p48
        %p176 = pneg %p45
        %s177 = sand.u32 %s63, 1
        %s178 = scalar_lea.sflag [#allocation3], %s177
        %s179 = sand.u32 %s63, 1
        %s180 = smul.addr %s179, 5
        %s181 = scalar_lea.vmem [#allocation6], %s180
        %p182 = pneg %p76
        %p183 = pneg %p73
        %p184 = pneg %p104
        %p185 = pneg %p101
        %s186 = sand.u32 %s91, 1
        %s187 = scalar_lea.sflag [#allocation4], %s186
        %s188 = sand.u32 %s91, 1
        %s189 = smul.addr %s188, 26
        %s190 = scalar_lea.vmem [#allocation7], %s189
        %v191 = vld [vmem:[%s169] sm:$0x1]
        %vm192 = vcmp.eq.f32.partialorder %v191, 1.0
        %vm193 = vcmp.eq.f32.partialorder %v191, 2.0
        %s194 = sld [smem:[#allocation2]]
        %v195 = vstv %s194
        %s196 = sld [smem:[#allocation2 + $0x8]]
        %v197 = vstv %s196
        %v198 = vsel %vm192, %v197, %v195
        %s199 = sld [smem:[#allocation2 + $0x10]]
        %v200 = vstv %s199
        %v201 = vsel %vm193, %v200, %v198
        %202 = vst [vmem:[%s190] sm:$0x1] %v201
        %s203 = sld [smem:[#allocation2 + $0x1]]
        %v204 = vstv %s203
        %s205 = sld [smem:[#allocation2 + $0x9]]
        %v206 = vstv %s205
        %v207 = vsel %vm192, %v206, %v204
        %s208 = sld [smem:[#allocation2 + $0x11]]
        %v209 = vstv %s208
        %v210 = vsel %vm193, %v209, %v207
        %s211 = scalar_lea.vmem %s190, 1 [#allocation7]
        %212 = vst [vmem:[%s211] sm:$0x1] %v210
        %s213 = sld [smem:[#allocation2 + $0x2]]
        %v214 = vstv %s213
        %s215 = sld [smem:[#allocation2 + $0xa]]
        %v216 = vstv %s215
        %v217 = vsel %vm192, %v216, %v214
        %s218 = sld [smem:[#allocation2 + $0x12]]
        %v219 = vstv %s218
        %v220 = vsel %vm193, %v219, %v217
        %s221 = scalar_lea.vmem %s190, 2 [#allocation7]
        %222 = vst [vmem:[%s221] sm:$0x1] %v220
        %s223 = sld [smem:[#allocation2 + $0x3]]
        %v224 = vstv %s223
        %s225 = sld [smem:[#allocation2 + $0xb]]
        %v226 = vstv %s225
        %v227 = vsel %vm192, %v226, %v224
        %s228 = sld [smem:[#allocation2 + $0x13]]
        %v229 = vstv %s228
        %v230 = vsel %vm193, %v229, %v227
        %s231 = scalar_lea.vmem %s190, 3 [#allocation7]
        %232 = vst [vmem:[%s231] sm:$0x1] %v230
        %s233 = sld [smem:[#allocation2 + $0x4]]
        %v234 = vstv %s233
        %s235 = sld [smem:[#allocation2 + $0xc]]
        %v236 = vstv %s235
        %v237 = vsel %vm192, %v236, %v234
        %s238 = sld [smem:[#allocation2 + $0x14]]
        %v239 = vstv %s238
        %v240 = vsel %vm193, %v239, %v237
        %s241 = scalar_lea.vmem %s190, 4 [#allocation7]
        %242 = vst [vmem:[%s241] sm:$0x1] %v240
        %s243 = sld [smem:[#allocation2 + $0x5]]
        %v244 = vstv %s243
        %s245 = sld [smem:[#allocation2 + $0xd]]
        %v246 = vstv %s245
        %v247 = vsel %vm192, %v246, %v244
        %s248 = sld [smem:[#allocation2 + $0x15]]
        %v249 = vstv %s248
        %v250 = vsel %vm193, %v249, %v247
        %s251 = scalar_lea.vmem %s190, 5 [#allocation7]
        %252 = vst [vmem:[%s251] sm:$0x1] %v250
        %s253 = sld [smem:[#allocation2 + $0x6]]
        %v254 = vstv %s253
        %s255 = sld [smem:[#allocation2 + $0xe]]
        %v256 = vstv %s255
        %v257 = vsel %vm192, %v256, %v254
        %s258 = sld [smem:[#allocation2 + $0x16]]
        %v259 = vstv %s258
        %v260 = vsel %vm193, %v259, %v257
        %s261 = scalar_lea.vmem %s190, 6 [#allocation7]
        %262 = vst [vmem:[%s261] sm:$0x1] %v260
        %s263 = sld [smem:[#allocation2 + $0x7]]
        %v264 = vstv %s263
        %s265 = sld [smem:[#allocation2 + $0xf]]
        %v266 = vstv %s265
        %v267 = vsel %vm192, %v266, %v264
        %s268 = sld [smem:[#allocation2 + $0x17]]
        %v269 = vstv %s268
        %v270 = vsel %vm193, %v269, %v267
        %s271 = scalar_lea.vmem %s190, 7 [#allocation7]
        %272 = vst [vmem:[%s271] sm:$0x1] %v270
        %s273 = scalar_lea.vmem %s169, 1 [#allocation6]
        %v274 = vld [vmem:[%s273] sm:$0x1]
        %vm275 = vcmp.eq.f32.partialorder %v274, 1.0
        %vm276 = vcmp.eq.f32.partialorder %v274, 2.0
        %vm277 = vcmp.eq.f32.partialorder %v274, 3.0
        %vm278 = vcmp.eq.f32.partialorder %v274, 4.0
        %vm279 = vcmp.eq.f32.partialorder %v274, 5.0
        %vm280 = vcmp.eq.f32.partialorder %v274, 6.0
        %vm281 = vcmp.eq.f32.partialorder %v274, 7.0
        %vm282 = vcmp.eq.f32.partialorder %v274, 8.0
        %vm283 = vcmp.eq.f32.partialorder %v274, 9.0
        %vm284 = vcmp.eq.f32.partialorder %v274, 10.0
        %vm285 = vcmp.eq.f32.partialorder %v274, 11.0
        %vm286 = vcmp.eq.f32.partialorder %v274, 12.0
        %s287 = sld [smem:[#allocation2 + $0x18]]
        %v288 = vstv %s287
        %s289 = sld [smem:[#allocation2 + $0x20]]
        %v290 = vstv %s289
        %v291 = vsel %vm275, %v290, %v288
        %s292 = sld [smem:[#allocation2 + $0x28]]
        %v293 = vstv %s292
        %v294 = vsel %vm276, %v293, %v291
        %s295 = sld [smem:[#allocation2 + $0x30]]
        %v296 = vstv %s295
        %v297 = vsel %vm277, %v296, %v294
        %s298 = sld [smem:[#allocation2 + $0x38]]
        %v299 = vstv %s298
        %v300 = vsel %vm278, %v299, %v297
        %s301 = sld [smem:[#allocation2 + $0x40]]
        %v302 = vstv %s301
        %v303 = vsel %vm279, %v302, %v300
        %s304 = sld [smem:[#allocation2 + $0x48]]
        %v305 = vstv %s304
        %v306 = vsel %vm280, %v305, %v303
        %s307 = sld [smem:[#allocation2 + $0x50]]
        %v308 = vstv %s307
        %v309 = vsel %vm281, %v308, %v306
        %s310 = sld [smem:[#allocation2 + $0x58]]
        %v311 = vstv %s310
        %v312 = vsel %vm282, %v311, %v309
        %s313 = sld [smem:[#allocation2 + $0x60]]
        %v314 = vstv %s313
        %v315 = vsel %vm283, %v314, %v312
        %s316 = sld [smem:[#allocation2 + $0x68]]
        %v317 = vstv %s316
        %v318 = vsel %vm284, %v317, %v315
        %s319 = sld [smem:[#allocation2 + $0x70]]
        %v320 = vstv %s319
        %v321 = vsel %vm285, %v320, %v318
        %s322 = sld [smem:[#allocation2 + $0x78]]
        %v323 = vstv %s322
        %v324 = vsel %vm286, %v323, %v321
        %s325 = scalar_lea.vmem %s190, 8 [#allocation7]
        %326 = vst [vmem:[%s325] sm:$0x1] %v324
        %s327 = sld [smem:[#allocation2 + $0x19]]
        %v328 = vstv %s327
        %s329 = sld [smem:[#allocation2 + $0x21]]
        %v330 = vstv %s329
        %v331 = vsel %vm275, %v330, %v328
        %s332 = sld [smem:[#allocation2 + $0x29]]
        %v333 = vstv %s332
        %v334 = vsel %vm276, %v333, %v331
        %s335 = sld [smem:[#allocation2 + $0x31]]
        %v336 = vstv %s335
        %v337 = vsel %vm277, %v336, %v334
        %s338 = sld [smem:[#allocation2 + $0x39]]
        %v339 = vstv %s338
        %v340 = vsel %vm278, %v339, %v337
        %s341 = sld [smem:[#allocation2 + $0x41]]
        %v342 = vstv %s341
        %v343 = vsel %vm279, %v342, %v340
        %s344 = sld [smem:[#allocation2 + $0x49]]
        %v345 = vstv %s344
        %v346 = vsel %vm280, %v345, %v343
        %s347 = sld [smem:[#allocation2 + $0x51]]
        %v348 = vstv %s347
        %v349 = vsel %vm281, %v348, %v346
        %s350 = sld [smem:[#allocation2 + $0x59]]
        %v351 = vstv %s350
        %v352 = vsel %vm282, %v351, %v349
        %s353 = sld [smem:[#allocation2 + $0x61]]
        %v354 = vstv %s353
        %v355 = vsel %vm283, %v354, %v352
        %s356 = sld [smem:[#allocation2 + $0x69]]
        %v357 = vstv %s356
        %v358 = vsel %vm284, %v357, %v355
        %s359 = sld [smem:[#allocation2 + $0x71]]
        %v360 = vstv %s359
        %v361 = vsel %vm285, %v360, %v358
        %s362 = sld [smem:[#allocation2 + $0x79]]
        %v363 = vstv %s362
        %v364 = vsel %vm286, %v363, %v361
        %s365 = scalar_lea.vmem %s190, 9 [#allocation7]
        %366 = vst [vmem:[%s365] sm:$0x1] %v364
        %s367 = sld [smem:[#allocation2 + $0x1a]]
        %v368 = vstv %s367
        %s369 = sld [smem:[#allocation2 + $0x22]]
        %v370 = vstv %s369
        %v371 = vsel %vm275, %v370, %v368
        %s372 = sld [smem:[#allocation2 + $0x2a]]
        %v373 = vstv %s372
        %v374 = vsel %vm276, %v373, %v371
        %s375 = sld [smem:[#allocation2 + $0x32]]
        %v376 = vstv %s375
        %v377 = vsel %vm277, %v376, %v374
        %s378 = sld [smem:[#allocation2 + $0x3a]]
        %v379 = vstv %s378
        %v380 = vsel %vm278, %v379, %v377
        %s381 = sld [smem:[#allocation2 + $0x42]]
        %v382 = vstv %s381
        %v383 = vsel %vm279, %v382, %v380
        %s384 = sld [smem:[#allocation2 + $0x4a]]
        %v385 = vstv %s384
        %v386 = vsel %vm280, %v385, %v383
        %s387 = sld [smem:[#allocation2 + $0x52]]
        %v388 = vstv %s387
        %v389 = vsel %vm281, %v388, %v386
        %s390 = sld [smem:[#allocation2 + $0x5a]]
        %v391 = vstv %s390
        %v392 = vsel %vm282, %v391, %v389
        %s393 = sld [smem:[#allocation2 + $0x62]]
        %v394 = vstv %s393
        %v395 = vsel %vm283, %v394, %v392
        %s396 = sld [smem:[#allocation2 + $0x6a]]
        %v397 = vstv %s396
        %v398 = vsel %vm284, %v397, %v395
        %s399 = sld [smem:[#allocation2 + $0x72]]
        %v400 = vstv %s399
        %v401 = vsel %vm285, %v400, %v398
        %s402 = sld [smem:[#allocation2 + $0x7a]]
        %v403 = vstv %s402
        %v404 = vsel %vm286, %v403, %v401
        %s405 = scalar_lea.vmem %s190, 10 [#allocation7]
        %406 = vst [vmem:[%s405] sm:$0x1] %v404
        %s407 = sld [smem:[#allocation2 + $0x1b]]
        %v408 = vstv %s407
        %s409 = sld [smem:[#allocation2 + $0x23]]
        %v410 = vstv %s409
        %v411 = vsel %vm275, %v410, %v408
        %s412 = sld [smem:[#allocation2 + $0x2b]]
        %v413 = vstv %s412
        %v414 = vsel %vm276, %v413, %v411
        %s415 = sld [smem:[#allocation2 + $0x33]]
        %v416 = vstv %s415
        %v417 = vsel %vm277, %v416, %v414
        %s418 = sld [smem:[#allocation2 + $0x3b]]
        %v419 = vstv %s418
        %v420 = vsel %vm278, %v419, %v417
        %s421 = sld [smem:[#allocation2 + $0x43]]
        %v422 = vstv %s421
        %v423 = vsel %vm279, %v422, %v420
        %s424 = sld [smem:[#allocation2 + $0x4b]]
        %v425 = vstv %s424
        %v426 = vsel %vm280, %v425, %v423
        %s427 = sld [smem:[#allocation2 + $0x53]]
        %v428 = vstv %s427
        %v429 = vsel %vm281, %v428, %v426
        %s430 = sld [smem:[#allocation2 + $0x5b]]
        %v431 = vstv %s430
        %v432 = vsel %vm282, %v431, %v429
        %s433 = sld [smem:[#allocation2 + $0x63]]
        %v434 = vstv %s433
        %v435 = vsel %vm283, %v434, %v432
        %s436 = sld [smem:[#allocation2 + $0x6b]]
        %v437 = vstv %s436
        %v438 = vsel %vm284, %v437, %v435
        %s439 = sld [smem:[#allocation2 + $0x73]]
        %v440 = vstv %s439
        %v441 = vsel %vm285, %v440, %v438
        %s442 = sld [smem:[#allocation2 + $0x7b]]
        %v443 = vstv %s442
        %v444 = vsel %vm286, %v443, %v441
        %s445 = scalar_lea.vmem %s190, 11 [#allocation7]
        %446 = vst [vmem:[%s445] sm:$0x1] %v444
        %s447 = sld [smem:[#allocation2 + $0x1c]]
        %v448 = vstv %s447
        %s449 = sld [smem:[#allocation2 + $0x24]]
        %v450 = vstv %s449
        %v451 = vsel %vm275, %v450, %v448
        %s452 = sld [smem:[#allocation2 + $0x2c]]
        %v453 = vstv %s452
        %v454 = vsel %vm276, %v453, %v451
        %s455 = sld [smem:[#allocation2 + $0x34]]
        %v456 = vstv %s455
        %v457 = vsel %vm277, %v456, %v454
        %s458 = sld [smem:[#allocation2 + $0x3c]]
        %v459 = vstv %s458
        %v460 = vsel %vm278, %v459, %v457
        %s461 = sld [smem:[#allocation2 + $0x44]]
        %v462 = vstv %s461
        %v463 = vsel %vm279, %v462, %v460
        %s464 = sld [smem:[#allocation2 + $0x4c]]
        %v465 = vstv %s464
        %v466 = vsel %vm280, %v465, %v463
        %s467 = sld [smem:[#allocation2 + $0x54]]
        %v468 = vstv %s467
        %v469 = vsel %vm281, %v468, %v466
        %s470 = sld [smem:[#allocation2 + $0x5c]]
        %v471 = vstv %s470
        %v472 = vsel %vm282, %v471, %v469
        %s473 = sld [smem:[#allocation2 + $0x64]]
        %v474 = vstv %s473
        %v475 = vsel %vm283, %v474, %v472
        %s476 = sld [smem:[#allocation2 + $0x6c]]
        %v477 = vstv %s476
        %v478 = vsel %vm284, %v477, %v475
        %s479 = sld [smem:[#allocation2 + $0x74]]
        %v480 = vstv %s479
        %v481 = vsel %vm285, %v480, %v478
        %s482 = sld [smem:[#allocation2 + $0x7c]]
        %v483 = vstv %s482
        %v484 = vsel %vm286, %v483, %v481
        %s485 = scalar_lea.vmem %s190, 12 [#allocation7]
        %486 = vst [vmem:[%s485] sm:$0x1] %v484
        %s487 = sld [smem:[#allocation2 + $0x1d]]
        %v488 = vstv %s487
        %s489 = sld [smem:[#allocation2 + $0x25]]
        %v490 = vstv %s489
        %v491 = vsel %vm275, %v490, %v488
        %s492 = sld [smem:[#allocation2 + $0x2d]]
        %v493 = vstv %s492
        %v494 = vsel %vm276, %v493, %v491
        %s495 = sld [smem:[#allocation2 + $0x35]]
        %v496 = vstv %s495
        %v497 = vsel %vm277, %v496, %v494
        %s498 = sld [smem:[#allocation2 + $0x3d]]
        %v499 = vstv %s498
        %v500 = vsel %vm278, %v499, %v497
        %s501 = sld [smem:[#allocation2 + $0x45]]
        %v502 = vstv %s501
        %v503 = vsel %vm279, %v502, %v500
        %s504 = sld [smem:[#allocation2 + $0x4d]]
        %v505 = vstv %s504
        %v506 = vsel %vm280, %v505, %v503
        %s507 = sld [smem:[#allocation2 + $0x55]]
        %v508 = vstv %s507
        %v509 = vsel %vm281, %v508, %v506
        %s510 = sld [smem:[#allocation2 + $0x5d]]
        %v511 = vstv %s510
        %v512 = vsel %vm282, %v511, %v509
        %s513 = sld [smem:[#allocation2 + $0x65]]
        %v514 = vstv %s513
        %v515 = vsel %vm283, %v514, %v512
        %s516 = sld [smem:[#allocation2 + $0x6d]]
        %v517 = vstv %s516
        %v518 = vsel %vm284, %v517, %v515
        %s519 = sld [smem:[#allocation2 + $0x75]]
        %v520 = vstv %s519
        %v521 = vsel %vm285, %v520, %v518
        %s522 = sld [smem:[#allocation2 + $0x7d]]
        %v523 = vstv %s522
        %v524 = vsel %vm286, %v523, %v521
        %s525 = scalar_lea.vmem %s190, 13 [#allocation7]
        %526 = vst [vmem:[%s525] sm:$0x1] %v524
        %s527 = sld [smem:[#allocation2 + $0x1e]]
        %v528 = vstv %s527
        %s529 = sld [smem:[#allocation2 + $0x26]]
        %v530 = vstv %s529
        %v531 = vsel %vm275, %v530, %v528
        %s532 = sld [smem:[#allocation2 + $0x2e]]
        %v533 = vstv %s532
        %v534 = vsel %vm276, %v533, %v531
        %s535 = sld [smem:[#allocation2 + $0x36]]
        %v536 = vstv %s535
        %v537 = vsel %vm277, %v536, %v534
        %s538 = sld [smem:[#allocation2 + $0x3e]]
        %v539 = vstv %s538
        %v540 = vsel %vm278, %v539, %v537
        %s541 = sld [smem:[#allocation2 + $0x46]]
        %v542 = vstv %s541
        %v543 = vsel %vm279, %v542, %v540
        %s544 = sld [smem:[#allocation2 + $0x4e]]
        %v545 = vstv %s544
        %v546 = vsel %vm280, %v545, %v543
        %s547 = sld [smem:[#allocation2 + $0x56]]
        %v548 = vstv %s547
        %v549 = vsel %vm281, %v548, %v546
        %s550 = sld [smem:[#allocation2 + $0x5e]]
        %v551 = vstv %s550
        %v552 = vsel %vm282, %v551, %v549
        %s553 = sld [smem:[#allocation2 + $0x66]]
        %v554 = vstv %s553
        %v555 = vsel %vm283, %v554, %v552
        %s556 = sld [smem:[#allocation2 + $0x6e]]
        %v557 = vstv %s556
        %v558 = vsel %vm284, %v557, %v555
        %s559 = sld [smem:[#allocation2 + $0x76]]
        %v560 = vstv %s559
        %v561 = vsel %vm285, %v560, %v558
        %s562 = sld [smem:[#allocation2 + $0x7e]]
        %v563 = vstv %s562
        %v564 = vsel %vm286, %v563, %v561
        %s565 = scalar_lea.vmem %s190, 14 [#allocation7]
        %566 = vst [vmem:[%s565] sm:$0x1] %v564
        %s567 = sld [smem:[#allocation2 + $0x1f]]
        %v568 = vstv %s567
        %s569 = sld [smem:[#allocation2 + $0x27]]
        %v570 = vstv %s569
        %v571 = vsel %vm275, %v570, %v568
        %s572 = sld [smem:[#allocation2 + $0x2f]]
        %v573 = vstv %s572
        %v574 = vsel %vm276, %v573, %v571
        %s575 = sld [smem:[#allocation2 + $0x37]]
        %v576 = vstv %s575
        %v577 = vsel %vm277, %v576, %v574
        %s578 = sld [smem:[#allocation2 + $0x3f]]
        %v579 = vstv %s578
        %v580 = vsel %vm278, %v579, %v577
        %s581 = sld [smem:[#allocation2 + $0x47]]
        %v582 = vstv %s581
        %v583 = vsel %vm279, %v582, %v580
        %s584 = sld [smem:[#allocation2 + $0x4f]]
        %v585 = vstv %s584
        %v586 = vsel %vm280, %v585, %v583
        %s587 = sld [smem:[#allocation2 + $0x57]]
        %v588 = vstv %s587
        %v589 = vsel %vm281, %v588, %v586
        %s590 = sld [smem:[#allocation2 + $0x5f]]
        %v591 = vstv %s590
        %v592 = vsel %vm282, %v591, %v589
        %s593 = sld [smem:[#allocation2 + $0x67]]
        %v594 = vstv %s593
        %v595 = vsel %vm283, %v594, %v592
        %s596 = sld [smem:[#allocation2 + $0x6f]]
        %v597 = vstv %s596
        %v598 = vsel %vm284, %v597, %v595
        %s599 = sld [smem:[#allocation2 + $0x77]]
        %v600 = vstv %s599
        %v601 = vsel %vm285, %v600, %v598
        %s602 = sld [smem:[#allocation2 + $0x7f]]
        %v603 = vstv %s602
        %v604 = vsel %vm286, %v603, %v601
        %s605 = scalar_lea.vmem %s190, 15 [#allocation7]
        %606 = vst [vmem:[%s605] sm:$0x1] %v604
        %s607 = scalar_lea.vmem %s169, 2 [#allocation6]
        %v608 = vld [vmem:[%s607] sm:$0x1]
        %vm609 = vcmp.eq.f32.partialorder %v608, 1.0
        %vm610 = vcmp.eq.f32.partialorder %v608, 2.0
        %vm611 = vcmp.eq.f32.partialorder %v608, 3.0
        %vm612 = vcmp.eq.f32.partialorder %v608, 4.0
        %vm613 = vcmp.eq.f32.partialorder %v608, 5.0
        %vm614 = vcmp.eq.f32.partialorder %v608, 6.0
        %vm615 = vcmp.eq.f32.partialorder %v608, 7.0
        %s616 = sld [smem:[#allocation2 + $0x80]]
        %v617 = vstv %s616
        %s618 = sld [smem:[#allocation2 + $0x88]]
        %v619 = vstv %s618
        %v620 = vsel %vm609, %v619, %v617
        %s621 = sld [smem:[#allocation2 + $0x90]]
        %v622 = vstv %s621
        %v623 = vsel %vm610, %v622, %v620
        %s624 = sld [smem:[#allocation2 + $0x98]]
        %v625 = vstv %s624
        %v626 = vsel %vm611, %v625, %v623
        %s627 = sld [smem:[#allocation2 + $0xa0]]
        %v628 = vstv %s627
        %v629 = vsel %vm612, %v628, %v626
        %s630 = sld [smem:[#allocation2 + $0xa8]]
        %v631 = vstv %s630
        %v632 = vsel %vm613, %v631, %v629
        %s633 = sld [smem:[#allocation2 + $0xb0]]
        %v634 = vstv %s633
        %v635 = vsel %vm614, %v634, %v632
        %s636 = sld [smem:[#allocation2 + $0xb8]]
        %v637 = vstv %s636
        %v638 = vsel %vm615, %v637, %v635
        %s639 = scalar_lea.vmem %s190, 16 [#allocation7]
        %640 = vst [vmem:[%s639] sm:$0x1] %v638
        %s641 = sld [smem:[#allocation2 + $0x81]]
        %v642 = vstv %s641
        %s643 = sld [smem:[#allocation2 + $0x89]]
        %v644 = vstv %s643
        %v645 = vsel %vm609, %v644, %v642
        %s646 = sld [smem:[#allocation2 + $0x91]]
        %v647 = vstv %s646
        %v648 = vsel %vm610, %v647, %v645
        %s649 = sld [smem:[#allocation2 + $0x99]]
        %v650 = vstv %s649
        %v651 = vsel %vm611, %v650, %v648
        %s652 = sld [smem:[#allocation2 + $0xa1]]
        %v653 = vstv %s652
        %v654 = vsel %vm612, %v653, %v651
        %s655 = sld [smem:[#allocation2 + $0xa9]]
        %v656 = vstv %s655
        %v657 = vsel %vm613, %v656, %v654
        %s658 = sld [smem:[#allocation2 + $0xb1]]
        %v659 = vstv %s658
        %v660 = vsel %vm614, %v659, %v657
        %s661 = sld [smem:[#allocation2 + $0xb9]]
        %v662 = vstv %s661
        %v663 = vsel %vm615, %v662, %v660
        %s664 = scalar_lea.vmem %s190, 17 [#allocation7]
        %665 = vst [vmem:[%s664] sm:$0x1] %v663
        %s666 = sld [smem:[#allocation2 + $0x82]]
        %v667 = vstv %s666
        %s668 = sld [smem:[#allocation2 + $0x8a]]
        %v669 = vstv %s668
        %v670 = vsel %vm609, %v669, %v667
        %s671 = sld [smem:[#allocation2 + $0x92]]
        %v672 = vstv %s671
        %v673 = vsel %vm610, %v672, %v670
        %s674 = sld [smem:[#allocation2 + $0x9a]]
        %v675 = vstv %s674
        %v676 = vsel %vm611, %v675, %v673
        %s677 = sld [smem:[#allocation2 + $0xa2]]
        %v678 = vstv %s677
        %v679 = vsel %vm612, %v678, %v676
        %s680 = sld [smem:[#allocation2 + $0xaa]]
        %v681 = vstv %s680
        %v682 = vsel %vm613, %v681, %v679
        %s683 = sld [smem:[#allocation2 + $0xb2]]
        %v684 = vstv %s683
        %v685 = vsel %vm614, %v684, %v682
        %s686 = sld [smem:[#allocation2 + $0xba]]
        %v687 = vstv %s686
        %v688 = vsel %vm615, %v687, %v685
        %s689 = scalar_lea.vmem %s190, 18 [#allocation7]
        %690 = vst [vmem:[%s689] sm:$0x1] %v688
        %s691 = sld [smem:[#allocation2 + $0x83]]
        %v692 = vstv %s691
        %s693 = sld [smem:[#allocation2 + $0x8b]]
        %v694 = vstv %s693
        %v695 = vsel %vm609, %v694, %v692
        %s696 = sld [smem:[#allocation2 + $0x93]]
        %v697 = vstv %s696
        %v698 = vsel %vm610, %v697, %v695
        %s699 = sld [smem:[#allocation2 + $0x9b]]
        %v700 = vstv %s699
        %v701 = vsel %vm611, %v700, %v698
        %s702 = sld [smem:[#allocation2 + $0xa3]]
        %v703 = vstv %s702
        %v704 = vsel %vm612, %v703, %v701
        %s705 = sld [smem:[#allocation2 + $0xab]]
        %v706 = vstv %s705
        %v707 = vsel %vm613, %v706, %v704
        %s708 = sld [smem:[#allocation2 + $0xb3]]
        %v709 = vstv %s708
        %v710 = vsel %vm614, %v709, %v707
        %s711 = sld [smem:[#allocation2 + $0xbb]]
        %v712 = vstv %s711
        %v713 = vsel %vm615, %v712, %v710
        %s714 = scalar_lea.vmem %s190, 19 [#allocation7]
        %715 = vst [vmem:[%s714] sm:$0x1] %v713
        %s716 = sld [smem:[#allocation2 + $0x84]]
        %v717 = vstv %s716
        %s718 = sld [smem:[#allocation2 + $0x8c]]
        %v719 = vstv %s718
        %v720 = vsel %vm609, %v719, %v717
        %s721 = sld [smem:[#allocation2 + $0x94]]
        %v722 = vstv %s721
        %v723 = vsel %vm610, %v722, %v720
        %s724 = sld [smem:[#allocation2 + $0x9c]]
        %v725 = vstv %s724
        %v726 = vsel %vm611, %v725, %v723
        %s727 = sld [smem:[#allocation2 + $0xa4]]
        %v728 = vstv %s727
        %v729 = vsel %vm612, %v728, %v726
        %s730 = sld [smem:[#allocation2 + $0xac]]
        %v731 = vstv %s730
        %v732 = vsel %vm613, %v731, %v729
        %s733 = sld [smem:[#allocation2 + $0xb4]]
        %v734 = vstv %s733
        %v735 = vsel %vm614, %v734, %v732
        %s736 = sld [smem:[#allocation2 + $0xbc]]
        %v737 = vstv %s736
        %v738 = vsel %vm615, %v737, %v735
        %s739 = scalar_lea.vmem %s190, 20 [#allocation7]
        %740 = vst [vmem:[%s739] sm:$0x1] %v738
        %s741 = sld [smem:[#allocation2 + $0x85]]
        %v742 = vstv %s741
        %s743 = sld [smem:[#allocation2 + $0x8d]]
        %v744 = vstv %s743
        %v745 = vsel %vm609, %v744, %v742
        %s746 = sld [smem:[#allocation2 + $0x95]]
        %v747 = vstv %s746
        %v748 = vsel %vm610, %v747, %v745
        %s749 = sld [smem:[#allocation2 + $0x9d]]
        %v750 = vstv %s749
        %v751 = vsel %vm611, %v750, %v748
        %s752 = sld [smem:[#allocation2 + $0xa5]]
        %v753 = vstv %s752
        %v754 = vsel %vm612, %v753, %v751
        %s755 = sld [smem:[#allocation2 + $0xad]]
        %v756 = vstv %s755
        %v757 = vsel %vm613, %v756, %v754
        %s758 = sld [smem:[#allocation2 + $0xb5]]
        %v759 = vstv %s758
        %v760 = vsel %vm614, %v759, %v757
        %s761 = sld [smem:[#allocation2 + $0xbd]]
        %v762 = vstv %s761
        %v763 = vsel %vm615, %v762, %v760
        %s764 = scalar_lea.vmem %s190, 21 [#allocation7]
        %765 = vst [vmem:[%s764] sm:$0x1] %v763
        %s766 = sld [smem:[#allocation2 + $0x86]]
        %v767 = vstv %s766
        %s768 = sld [smem:[#allocation2 + $0x8e]]
        %v769 = vstv %s768
        %v770 = vsel %vm609, %v769, %v767
        %s771 = sld [smem:[#allocation2 + $0x96]]
        %v772 = vstv %s771
        %v773 = vsel %vm610, %v772, %v770
        %s774 = sld [smem:[#allocation2 + $0x9e]]
        %v775 = vstv %s774
        %v776 = vsel %vm611, %v775, %v773
        %s777 = sld [smem:[#allocation2 + $0xa6]]
        %v778 = vstv %s777
        %v779 = vsel %vm612, %v778, %v776
        %s780 = sld [smem:[#allocation2 + $0xae]]
        %v781 = vstv %s780
        %v782 = vsel %vm613, %v781, %v779
        %s783 = sld [smem:[#allocation2 + $0xb6]]
        %v784 = vstv %s783
        %v785 = vsel %vm614, %v784, %v782
        %s786 = sld [smem:[#allocation2 + $0xbe]]
        %v787 = vstv %s786
        %v788 = vsel %vm615, %v787, %v785
        %s789 = scalar_lea.vmem %s190, 22 [#allocation7]
        %790 = vst [vmem:[%s789] sm:$0x1] %v788
        %s791 = sld [smem:[#allocation2 + $0x87]]
        %v792 = vstv %s791
        %s793 = sld [smem:[#allocation2 + $0x8f]]
        %v794 = vstv %s793
        %v795 = vsel %vm609, %v794, %v792
        %s796 = sld [smem:[#allocation2 + $0x97]]
        %v797 = vstv %s796
        %v798 = vsel %vm610, %v797, %v795
        %s799 = sld [smem:[#allocation2 + $0x9f]]
        %v800 = vstv %s799
        %v801 = vsel %vm611, %v800, %v798
        %s802 = sld [smem:[#allocation2 + $0xa7]]
        %v803 = vstv %s802
        %v804 = vsel %vm612, %v803, %v801
        %s805 = sld [smem:[#allocation2 + $0xaf]]
        %v806 = vstv %s805
        %v807 = vsel %vm613, %v806, %v804
        %s808 = sld [smem:[#allocation2 + $0xb7]]
        %v809 = vstv %s808
        %v810 = vsel %vm614, %v809, %v807
        %s811 = sld [smem:[#allocation2 + $0xbf]]
        %v812 = vstv %s811
        %v813 = vsel %vm615, %v812, %v810
        %s814 = scalar_lea.vmem %s190, 23 [#allocation7]
        %815 = vst [vmem:[%s814] sm:$0x1] %v813
        %s816 = scalar_lea.vmem %s169, 3 [#allocation6]
        %v817 = vld [vmem:[%s816] sm:$0x1]
        %s818 = scalar_lea.vmem %s190, 24 [#allocation7]
        %819 = vst [vmem:[%s818] sm:$0x1] %v817
        %s820 = scalar_lea.vmem %s169, 4 [#allocation6]
        %v821 = vld [vmem:[%s820] sm:$0x1]
        %s822 = scalar_lea.vmem %s190, 25 [#allocation7]
        %823 = vst [vmem:[%s822] sm:$0x1] %v821
        %s824 = sand.u32 %s91, 1
        %s825 = scalar_lea.sflag [#allocation4], %s824
        %s826 = sand.u32 %s91, 1
        %s827 = smul.addr %s826, 26
        %s828 = scalar_lea.vmem [#allocation7], %s827
        // Predicated region
        $region37: #{tpu_custom_call.1} parent=27 // pred_check
          %p829 = pneg %p101
        $region38: #{tpu_custom_call.1} parent=27 // pred_check_branch
          %831 = sbr.rel (%p829) target = $region40
        $region39: #{tpu_custom_call.1} parent=27 // pred_region
          %s833 = ssub.s32 416, 416
          %834 = vsyncadd %s825, %s833
          %s835 = smul.addr %s24, 26
          %s836 = sadd.s32 %s25, %s835
          %s837 = smul.addr %s836, 16
          %s838 = scalar_lea.hbm %s2, %s837
          %s839 = sshll.u32 %s828, 4
          %s840 = int_to_ptr.vmem [resolvable:$true] %s839
          %845 = dma.vmem_to_hbm [thread:$0]  %s840, 416, %s838, %s825, 16, 16, 1
        $region40: #{tpu_custom_call.1} parent=27 // pred_fallthru
          _
      $region28: #{tpu_custom_call.1} parent=5 // pred_fallthru
        _
      %p846 = scmp.le.s32.totalorder 2, %s15
      // Predicated region
      $region41: #{tpu_custom_call.1} parent=5 // pred_check
        %p847 = pneg %p846
      $region42: #{tpu_custom_call.1} parent=5 // pred_check_branch
        %849 = sbr.rel (%p847) target = $region44
      $region43: #{tpu_custom_call.1} parent=5 // pred_region
        %s850 = ssub.s32 %s15, 2
        // Predicated region
        $region45: #{tpu_custom_call.1} parent=43 // pred_check
          %p851 = pneg %p107
        $region46: #{tpu_custom_call.1} parent=43 // pred_check_branch
          %853 = sbr.rel (%p851) target = $region48
        $region47: #{tpu_custom_call.1} parent=43 // pred_region
          %s854 = sand.u32 %s92, 1
          %s855 = scalar_lea.sflag [#allocation4], %s854
          %s856 = sand.u32 %s92, 1
          %s857 = smul.addr %s856, 26
          %s858 = scalar_lea.vmem [#allocation7], %s857
          %859 = dma.done %s855, 416
        $region48: #{tpu_custom_call.1} parent=43 // pred_fallthru
          _
      $region44: #{tpu_custom_call.1} parent=5 // pred_fallthru
        _
    $region6: #{tpu_custom_call.1} parent=1 // loop_footer
      %s19 = sadd.s32 1, %s15
    $region7: #{tpu_custom_call.1} parent=1 // loop_footer_branch
      %14 = sbr.rel target = $region3
    $region8: #{tpu_custom_call.1} parent=1 // loop_exit
      _
    %860 = vsyncpa [#allocation3], 1
    %s861 = scalar_lea.sflag [#allocation3], 1
    %862 = vsyncpa %s861, 1
    %863 = vsyncpa [#allocation4], 1
    %s864 = scalar_lea.sflag [#allocation4], 1
    %865 = vsyncpa %s864, 1
    %866 = vsyncpa [#allocation5], 1
    %s867 = scalar_lea.sflag [#allocation5], 1
    %868 = vsyncpa %s867, 1

</llo_original>
